<compile_context>
chip_gen: v6e
topology: v6e:2x2x1
jax: 0.10.0
libtpu: 0.0.40
codegen_flags: <defaults>
</compile_context>

<pallas_src>
import jax
import jax.numpy as jnp
from jax.experimental import pallas as pl
from jax.experimental.pallas import tpu as pltpu

H1 = 256
H2 = 128
LN_EPS = 1e-5  # PyTorch nn.LayerNorm default


def _layer_norm(h, gamma, beta):
    """Two-pass LayerNorm over the last axis (numerically robust)."""
    inv_n = 1.0 / h.shape[-1]
    mu = jnp.sum(h, axis=-1, keepdims=True) * inv_n
    d = h - mu
    var = jnp.sum(d * d, axis=-1, keepdims=True) * inv_n
    inv = jax.lax.rsqrt(var + LN_EPS)
    return d * (inv * gamma) + beta


def router_kernel(x_ref,
                  w1_ref, b1_ref, g1_ref, be1_ref,
                  w2_ref, b2_ref, g2_ref, be2_ref,
                  w3_ref,
                  o_ref):
    # In-kernel cast: x travels HBM->VMEM once in its original dtype; the bf16
    # cast is a cheap VPU op on a path that is not VPU-bound.
    x = x_ref[...].astype(jnp.bfloat16)

    # fc1 (bf16 MXU, f32 accumulate) -> LayerNorm -> ReLU   (dropout1 == identity)
    h1 = jnp.dot(x, w1_ref[...], preferred_element_type=jnp.float32)
    h1 = h1 + b1_ref[...]
    h1 = _layer_norm(h1, g1_ref[...], be1_ref[...])
    h1 = jnp.maximum(h1, 0.0)

    # fc2 (bf16 MXU, f32 accumulate) -> LayerNorm -> ReLU   (dropout2 == identity)
    h2 = jnp.dot(h1.astype(jnp.bfloat16), w2_ref[...],
                 preferred_element_type=jnp.float32)
    h2 = h2 + b2_ref[...]
    h2 = _layer_norm(h2, g2_ref[...], be2_ref[...])
    h2 = jnp.maximum(h2, 0.0)

    # fc3 as a thin matmul on the (otherwise idle) MXU -> (tile_b, 1).
    # Bias b3 is added in the wrapper.
    y = jnp.dot(h2, w3_ref[...], preferred_element_type=jnp.float32)
    o_ref[...] = y.astype(o_ref.dtype)


def _pick_tile_b(B, D):
    """Batch tile: as large as the VMEM budget allows, multiple of 128, <=2048.

    Budget is kept under the smallest default scoped VMEM limit across
    generations (v5e: 16 MiB) so no vmem_limit_bytes override is required on
    v5e/v6e/v7x.  When more than one grid step is needed, keep the step count
    even so v7x's two TensorCores split the 'parallel' axis evenly.
    """
    budget = 12 * 1024 * 1024
    weight_bytes = D * H1 * 2 + H1 * H2 * 2 + H2 * 4 + 8 * (H1 + H2) * 4
    per_row = 2 * D * 4           # double-buffered x tile (original f32 dtype)
    per_row += (H1 + H2) * 4      # f32 h1 / h2 intermediates
    per_row += 2 * 4              # double-buffered (tile_b, 1) output
    cap = max(128, ((budget - weight_bytes) // per_row) // 128 * 128)
    cap = min(cap, 2048)          # v7x-safe (64 MiB physical / 32 MiB scoped per TC)

    tile_b = min(cap, ((B + 127) // 128) * 128)
    grid = -(-B // tile_b)
    if grid > 1 and grid % 2 == 1:        # v7x megacore: even number of steps
        grid += 1
        tile_b = max(128, ((-(-B // grid) + 127) // 128) * 128)
    return tile_b


def corpus_routing_nn(x, kparams):
    """x: [B, input_dim]. kparams from prepare_params(). Returns [B, 1] f32."""
    B, D = x.shape
    (w1, b1, g1, be1, w2, b2, g2, be2, w3_col, b3) = kparams

    tile_b = _pick_tile_b(B, D)
    grid = pl.cdiv(B, tile_b)

    # Grid-invariant params use constant index_maps, so they stay VMEM-resident
    # across all grid steps (no per-step re-DMA).
    full = lambda *shape: pl.BlockSpec(shape, lambda i: (0,) * len(shape))

    out = pl.pallas_call(
        router_kernel,
        out_shape=jax.ShapeDtypeStruct((B, 1), jnp.float32),
        grid_spec=pltpu.PrefetchScalarGridSpec(
            num_scalar_prefetch=0,
            grid=(grid,),
            in_specs=[
                pl.BlockSpec((tile_b, D), lambda i: (i, 0)),  # x tile (orig dtype)
                full(D, H1),    # W1 (bf16)
                full(1, H1),    # b1
                full(1, H1),    # ln1 gamma
                full(1, H1),    # ln1 beta
                full(H1, H2),   # W2 (bf16)
                full(1, H2),    # b2
                full(1, H2),    # ln2 gamma
                full(1, H2),    # ln2 beta
                full(H2, 1),    # W3 column (f32)
            ],
            out_specs=pl.BlockSpec((tile_b, 1), lambda i: (i, 0)),
        ),
        compiler_params=pltpu.CompilerParams(
            dimension_semantics=("parallel",)),
    )(x, w1, b1, g1, be1, w2, b2, g2, be2, w3_col)

    # Scalar output bias added outside the kernel (one fewer operand / DMA).
    return out + b3


def prepare_params(params):
    """One-time conversion of f32 params into kernel-ready layout/dtypes."""
    (w1, b1, g1, be1, w2, b2, g2, be2, w3, b3) = params
    return (w1.astype(jnp.bfloat16), b1, g1, be1,
            w2.astype(jnp.bfloat16), b2, g2, be2,
            jnp.reshape(w3, (H2, 1)).astype(jnp.float32),
            jnp.reshape(b3, (1, 1)).astype(jnp.float32))


def init_params(key, input_dim):
    """Parameter init mirroring nn.Linear / nn.LayerNorm shapes.

    Linear weights stored transposed ([in, out]) relative to PyTorch's [out, in]
    so the kernel computes x @ W.  LayerNorm gamma=1, beta=0.
    """
    ks = jax.random.split(key, 6)

    def linear(kw, kb, fan_in, fan_out):
        bound = 1.0 / jnp.sqrt(fan_in)
        w = jax.random.uniform(kw, (fan_in, fan_out), jnp.float32, -bound, bound)
        b = jax.random.uniform(kb, (1, fan_out), jnp.float32, -bound, bound)
        return w, b

    w1, b1 = linear(ks[0], ks[1], input_dim, H1)
    w2, b2 = linear(ks[2], ks[3], H1, H2)
    w3, b3 = linear(ks[4], ks[5], H2, 1)
    g1, be1 = jnp.ones((1, H1), jnp.float32), jnp.zeros((1, H1), jnp.float32)
    g2, be2 = jnp.ones((1, H2), jnp.float32), jnp.zeros((1, H2), jnp.float32)
    return (w1, b1, g1, be1, w2, b2, g2, be2, w3, b3)


def _layer_norm_ref(x, gamma, beta):
    mu = jnp.mean(x, axis=-1, keepdims=True)
    var = jnp.mean((x - mu) * (x - mu), axis=-1, keepdims=True)
    return (x - mu) * jax.lax.rsqrt(var + LN_EPS) * gamma + beta


def reference_forward(x, params):
    """Pure-JAX f32 reference of the PyTorch forward (inference mode)."""
    (w1, b1, g1, be1, w2, b2, g2, be2, w3, b3) = params
    h1 = jnp.maximum(_layer_norm_ref(x @ w1 + b1, g1, be1), 0.0)
    h2 = jnp.maximum(_layer_norm_ref(h1 @ w2 + b2, g2, be2), 0.0)
    return h2 @ w3 + b3


if __name__ == "__main__":
    key = jax.random.PRNGKey(0)
    k_x, k_p = jax.random.split(key)

    batch, input_dim = 16, 32
    x = jax.random.normal(k_x, (batch, input_dim), jnp.float32)
    params = init_params(k_p, input_dim)
    kparams = prepare_params(params)   # one-time bf16 / layout conversion

    out = corpus_routing_nn(x, kparams)
    out = jax.block_until_ready(out)

    ref = reference_forward(x, params)
    assert out.shape == (batch, 1)
    # bf16 MXU operands (f32 accumulate) -> tolerance relaxed vs. the pure-f32 ref.
    assert jnp.allclose(out, ref, atol=5e-2, rtol=5e-2), (
        f"max abs err {jnp.max(jnp.abs(out - ref))}")

    print("KERNEL_OK")
</pallas_src>

<mosaic_0001>
module attributes {stable_mosaic.version = 11 : i64} {
  func.func @router_kernel(%arg0: i32, %arg1: memref<128x32xf32, #tpu.memory_space<vmem>>, %arg2: memref<32x256xbf16, #tpu.memory_space<vmem>>, %arg3: memref<1x256xf32, #tpu.memory_space<vmem>>, %arg4: memref<1x256xf32, #tpu.memory_space<vmem>>, %arg5: memref<1x256xf32, #tpu.memory_space<vmem>>, %arg6: memref<256x128xbf16, #tpu.memory_space<vmem>>, %arg7: memref<1x128xf32, #tpu.memory_space<vmem>>, %arg8: memref<1x128xf32, #tpu.memory_space<vmem>>, %arg9: memref<1x128xf32, #tpu.memory_space<vmem>>, %arg10: memref<128x1xf32, #tpu.memory_space<vmem>>, %arg11: memref<128x1xf32, #tpu.memory_space<vmem>>) attributes {dimension_semantics = [#tpu.dimension_semantics<parallel>], iteration_bounds = array<i64: 1>, scalar_prefetch = 0 : i64, scratch_operands = 0 : i64, tpu.core_type = #tpu.core_type<tc>, window_params = [{transform_indices = @transform_0, window_bounds = array<i64: 128, 32>}, {pipeline_mode = #tpu.pipeline_mode<synchronous>, transform_indices = @transform_1, window_bounds = array<i64: 32, 256>}, {pipeline_mode = #tpu.pipeline_mode<synchronous>, transform_indices = @transform_2, window_bounds = array<i64: 1, 256>}, {pipeline_mode = #tpu.pipeline_mode<synchronous>, transform_indices = @transform_3, window_bounds = array<i64: 1, 256>}, {pipeline_mode = #tpu.pipeline_mode<synchronous>, transform_indices = @transform_4, window_bounds = array<i64: 1, 256>}, {pipeline_mode = #tpu.pipeline_mode<synchronous>, transform_indices = @transform_5, window_bounds = array<i64: 256, 128>}, {pipeline_mode = #tpu.pipeline_mode<synchronous>, transform_indices = @transform_6, window_bounds = array<i64: 1, 128>}, {pipeline_mode = #tpu.pipeline_mode<synchronous>, transform_indices = @transform_7, window_bounds = array<i64: 1, 128>}, {pipeline_mode = #tpu.pipeline_mode<synchronous>, transform_indices = @transform_8, window_bounds = array<i64: 1, 128>}, {pipeline_mode = #tpu.pipeline_mode<synchronous>, transform_indices = @transform_9, window_bounds = array<i64: 128, 1>}, {transform_indices = @transform_10, window_bounds = array<i64: 128, 1>}]} {
    %c0 = arith.constant 0 : index
    %c0_0 = arith.constant 0 : index
    %0 = vector.load %arg1[%c0, %c0_0] : memref<128x32xf32, #tpu.memory_space<vmem>>, vector<128x32xf32>
    %1 = arith.truncf %0 : vector<128x32xf32> to vector<128x32xbf16>
    %c0_1 = arith.constant 0 : index
    %c0_2 = arith.constant 0 : index
    %2 = vector.load %arg2[%c0_1, %c0_2] : memref<32x256xbf16, #tpu.memory_space<vmem>>, vector<32x256xbf16>
    %cst = arith.constant dense<0.000000e+00> : vector<128x256xf32>
    %3 = tpu.matmul %1, %2, %cst {dimension_numbers = #tpu.dot_dimension_numbers<[1], [0], [0], [1], [0, 0, 1, 1], [], []>} : vector<128x32xbf16>, vector<32x256xbf16>, vector<128x256xf32> -> vector<128x256xf32>
    %c0_3 = arith.constant 0 : index
    %c0_4 = arith.constant 0 : index
    %4 = vector.load %arg3[%c0_3, %c0_4] : memref<1x256xf32, #tpu.memory_space<vmem>>, vector<1x256xf32>
    %5 = vector.broadcast %4 : vector<1x256xf32> to vector<128x256xf32>
    %6 = arith.addf %3, %5 : vector<128x256xf32>
    %c0_5 = arith.constant 0 : index
    %c0_6 = arith.constant 0 : index
    %7 = vector.load %arg4[%c0_5, %c0_6] : memref<1x256xf32, #tpu.memory_space<vmem>>, vector<1x256xf32>
    %c0_7 = arith.constant 0 : index
    %c0_8 = arith.constant 0 : index
    %8 = vector.load %arg5[%c0_7, %c0_8] : memref<1x256xf32, #tpu.memory_space<vmem>>, vector<1x256xf32>
    %cst_9 = arith.constant dense<0.000000e+00> : vector<128xf32>
    %9 = vector.multi_reduction <add>, %6, %cst_9 [1] : vector<128x256xf32> to vector<128xf32>
    %10 = vector.shape_cast %9 : vector<128xf32> to vector<128x1xf32>
    %cst_10 = arith.constant 3.906250e-03 : f32
    %11 = vector.broadcast %cst_10 : f32 to vector<128x1xf32>
    %12 = arith.mulf %10, %11 : vector<128x1xf32>
    %13 = vector.broadcast %12 : vector<128x1xf32> to vector<128x256xf32>
    %14 = arith.subf %6, %13 : vector<128x256xf32>
    %15 = arith.mulf %14, %14 : vector<128x256xf32>
    %cst_11 = arith.constant dense<0.000000e+00> : vector<128xf32>
    %16 = vector.multi_reduction <add>, %15, %cst_11 [1] : vector<128x256xf32> to vector<128xf32>
    %17 = vector.shape_cast %16 : vector<128xf32> to vector<128x1xf32>
    %cst_12 = arith.constant 3.906250e-03 : f32
    %18 = vector.broadcast %cst_12 : f32 to vector<128x1xf32>
    %19 = arith.mulf %17, %18 : vector<128x1xf32>
    %cst_13 = arith.constant 9.99999974E-6 : f32
    %20 = vector.broadcast %cst_13 : f32 to vector<128x1xf32>
    %21 = arith.addf %19, %20 : vector<128x1xf32>
    %22 = math.rsqrt %21 : vector<128x1xf32>
    %23 = vector.broadcast %22 : vector<128x1xf32> to vector<128x256xf32>
    %24 = vector.broadcast %7 : vector<1x256xf32> to vector<128x256xf32>
    %25 = arith.mulf %23, %24 : vector<128x256xf32>
    %26 = arith.mulf %14, %25 : vector<128x256xf32>
    %27 = vector.broadcast %8 : vector<1x256xf32> to vector<128x256xf32>
    %28 = arith.addf %26, %27 : vector<128x256xf32>
    %cst_14 = arith.constant 0.000000e+00 : f32
    %29 = vector.broadcast %cst_14 : f32 to vector<128x256xf32>
    %30 = arith.maximumf %28, %29 : vector<128x256xf32>
    %31 = arith.truncf %30 : vector<128x256xf32> to vector<128x256xbf16>
    %c0_15 = arith.constant 0 : index
    %c0_16 = arith.constant 0 : index
    %32 = vector.load %arg6[%c0_15, %c0_16] : memref<256x128xbf16, #tpu.memory_space<vmem>>, vector<256x128xbf16>
    %cst_17 = arith.constant dense<0.000000e+00> : vector<128x128xf32>
    %33 = tpu.matmul %31, %32, %cst_17 {dimension_numbers = #tpu.dot_dimension_numbers<[1], [0], [0], [1], [0, 0, 1, 1], [], []>} : vector<128x256xbf16>, vector<256x128xbf16>, vector<128x128xf32> -> vector<128x128xf32>
    %c0_18 = arith.constant 0 : index
    %c0_19 = arith.constant 0 : index
    %34 = vector.load %arg7[%c0_18, %c0_19] : memref<1x128xf32, #tpu.memory_space<vmem>>, vector<1x128xf32>
    %35 = vector.broadcast %34 : vector<1x128xf32> to vector<128x128xf32>
    %36 = arith.addf %33, %35 : vector<128x128xf32>
    %c0_20 = arith.constant 0 : index
    %c0_21 = arith.constant 0 : index
    %37 = vector.load %arg8[%c0_20, %c0_21] : memref<1x128xf32, #tpu.memory_space<vmem>>, vector<1x128xf32>
    %c0_22 = arith.constant 0 : index
    %c0_23 = arith.constant 0 : index
    %38 = vector.load %arg9[%c0_22, %c0_23] : memref<1x128xf32, #tpu.memory_space<vmem>>, vector<1x128xf32>
    %cst_24 = arith.constant dense<0.000000e+00> : vector<128xf32>
    %39 = vector.multi_reduction <add>, %36, %cst_24 [1] : vector<128x128xf32> to vector<128xf32>
    %40 = vector.shape_cast %39 : vector<128xf32> to vector<128x1xf32>
    %cst_25 = arith.constant 7.812500e-03 : f32
    %41 = vector.broadcast %cst_25 : f32 to vector<128x1xf32>
    %42 = arith.mulf %40, %41 : vector<128x1xf32>
    %43 = vector.broadcast %42 : vector<128x1xf32> to vector<128x128xf32>
    %44 = arith.subf %36, %43 : vector<128x128xf32>
    %45 = arith.mulf %44, %44 : vector<128x128xf32>
    %cst_26 = arith.constant dense<0.000000e+00> : vector<128xf32>
    %46 = vector.multi_reduction <add>, %45, %cst_26 [1] : vector<128x128xf32> to vector<128xf32>
    %47 = vector.shape_cast %46 : vector<128xf32> to vector<128x1xf32>
    %cst_27 = arith.constant 7.812500e-03 : f32
    %48 = vector.broadcast %cst_27 : f32 to vector<128x1xf32>
    %49 = arith.mulf %47, %48 : vector<128x1xf32>
    %cst_28 = arith.constant 9.99999974E-6 : f32
    %50 = vector.broadcast %cst_28 : f32 to vector<128x1xf32>
    %51 = arith.addf %49, %50 : vector<128x1xf32>
    %52 = math.rsqrt %51 : vector<128x1xf32>
    %53 = vector.broadcast %52 : vector<128x1xf32> to vector<128x128xf32>
    %54 = vector.broadcast %37 : vector<1x128xf32> to vector<128x128xf32>
    %55 = arith.mulf %53, %54 : vector<128x128xf32>
    %56 = arith.mulf %44, %55 : vector<128x128xf32>
    %57 = vector.broadcast %38 : vector<1x128xf32> to vector<128x128xf32>
    %58 = arith.addf %56, %57 : vector<128x128xf32>
    %cst_29 = arith.constant 0.000000e+00 : f32
    %59 = vector.broadcast %cst_29 : f32 to vector<128x128xf32>
    %60 = arith.maximumf %58, %59 : vector<128x128xf32>
    %c0_30 = arith.constant 0 : index
    %c0_31 = arith.constant 0 : index
    %61 = vector.load %arg10[%c0_30, %c0_31] : memref<128x1xf32, #tpu.memory_space<vmem>>, vector<128x1xf32>
    %cst_32 = arith.constant dense<0.000000e+00> : vector<128x1xf32>
    %62 = tpu.matmul %60, %61, %cst_32 {dimension_numbers = #tpu.dot_dimension_numbers<[1], [0], [0], [1], [0, 0, 1, 1], [], []>} : vector<128x128xf32>, vector<128x1xf32>, vector<128x1xf32> -> vector<128x1xf32>
    %c0_33 = arith.constant 0 : index
    %c0_34 = arith.constant 0 : index
    %63 = vector.load %arg11[%c0_33, %c0_34] : memref<128x1xf32, #tpu.memory_space<vmem>>, vector<128x1xf32>
    tpu.vector_store %arg11[%c0_33, %c0_34], %62 {strides = array<i32>} : memref<128x1xf32, #tpu.memory_space<vmem>>, vector<128x1xf32>,
    return
  }
  func.func @transform_0(%arg0: i32) -> (i32, i32) {
    %c0_i32 = arith.constant 0 : i32
    %c0_i32_0 = arith.constant 0 : i32
    return %arg0, %c0_i32 : i32, i32
  }
  func.func @transform_1(%arg0: i32) -> (i32, i32) {
    %c0_i32 = arith.constant 0 : i32
    %c0_i32_0 = arith.constant 0 : i32
    %c0_i32_1 = arith.constant 0 : i32
    return %c0_i32, %c0_i32_0 : i32, i32
  }
  func.func @transform_2(%arg0: i32) -> (i32, i32) {
    %c0_i32 = arith.constant 0 : i32
    %c0_i32_0 = arith.constant 0 : i32
    %c0_i32_1 = arith.constant 0 : i32
    return %c0_i32, %c0_i32_0 : i32, i32
  }
  func.func @transform_3(%arg0: i32) -> (i32, i32) {
    %c0_i32 = arith.constant 0 : i32
    %c0_i32_0 = arith.constant 0 : i32
    %c0_i32_1 = arith.constant 0 : i32
    return %c0_i32, %c0_i32_0 : i32, i32
  }
  func.func @transform_4(%arg0: i32) -> (i32, i32) {
    %c0_i32 = arith.constant 0 : i32
    %c0_i32_0 = arith.constant 0 : i32
    %c0_i32_1 = arith.constant 0 : i32
    return %c0_i32, %c0_i32_0 : i32, i32
  }
  func.func @transform_5(%arg0: i32) -> (i32, i32) {
    %c0_i32 = arith.constant 0 : i32
    %c0_i32_0 = arith.constant 0 : i32
    %c0_i32_1 = arith.constant 0 : i32
    return %c0_i32, %c0_i32_0 : i32, i32
  }
  func.func @transform_6(%arg0: i32) -> (i32, i32) {
    %c0_i32 = arith.constant 0 : i32
    %c0_i32_0 = arith.constant 0 : i32
    %c0_i32_1 = arith.constant 0 : i32
    return %c0_i32, %c0_i32_0 : i32, i32
  }
  func.func @transform_7(%arg0: i32) -> (i32, i32) {
    %c0_i32 = arith.constant 0 : i32
    %c0_i32_0 = arith.constant 0 : i32
    %c0_i32_1 = arith.constant 0 : i32
    return %c0_i32, %c0_i32_0 : i32, i32
  }
  func.func @transform_8(%arg0: i32) -> (i32, i32) {
    %c0_i32 = arith.constant 0 : i32
    %c0_i32_0 = arith.constant 0 : i32
    %c0_i32_1 = arith.constant 0 : i32
    return %c0_i32, %c0_i32_0 : i32, i32
  }
  func.func @transform_9(%arg0: i32) -> (i32, i32) {
    %c0_i32 = arith.constant 0 : i32
    %c0_i32_0 = arith.constant 0 : i32
    %c0_i32_1 = arith.constant 0 : i32
    return %c0_i32, %c0_i32_0 : i32, i32
  }
  func.func @transform_10(%arg0: i32) -> (i32, i32) {
    %c0_i32 = arith.constant 0 : i32
    %c0_i32_0 = arith.constant 0 : i32
    return %arg0, %c0_i32 : i32, i32
  }
}

</mosaic_0001>

<llo_original>
// kernel: tpu_custom_call.1
$region0: #{tpu_custom_call.1}
  #allocation0 [shape = 'u32[]', space=smem, size = 0x4, offset = 0x4, fixed_abs, tag = 'smem constant byte address 0x4 - core index']
  #allocation1 [shape = 'u32[144,128]{1,0:T(1,128)}', space=vmem, size = 0x12000, scoped, tag = 'internal scratch']
  %s0 = inlined_call_operand.hbm [shape: f32[16,32], index: 0, kind: input, shape index: {}]
  %s1 = inlined_call_operand.hbm [shape: bf16[32,256], index: 1, kind: input, shape index: {}]
  %s2 = inlined_call_operand.vmem [shape: f32[1,256], index: 2, kind: input, shape index: {}]
  %s3 = inlined_call_operand.vmem [shape: f32[1,256], index: 3, kind: input, shape index: {}]
  %s4 = inlined_call_operand.vmem [shape: f32[1,256], index: 4, kind: input, shape index: {}]
  %s5 = inlined_call_operand.vmem [shape: bf16[256,128], index: 5, kind: input, shape index: {}]
  %s6 = inlined_call_operand.vmem [shape: f32[1,128], index: 6, kind: input, shape index: {}]
  %s7 = inlined_call_operand.vmem [shape: f32[1,128], index: 7, kind: input, shape index: {}]
  %s8 = inlined_call_operand.vmem [shape: f32[1,128], index: 8, kind: input, shape index: {}]
  %s9 = inlined_call_operand.vmem [shape: f32[128,1], index: 9, kind: input, shape index: {}]
  %s10 = inlined_call_operand.vmem [shape: f32[16,1], index: 10, kind: output, shape index: {}]
  %s11 = sld [smem:[#allocation0]]
  $region92: #{tpu_custom_call.1} parent=0
    _
  %s13 = ssub.s32 1, %s11
  %s14 = scalar_select 0, %s13, %s11
  $region1: #{tpu_custom_call.1} parent=0
    #allocation2 [shape = 'u8[65536]{0}', space=vmem, size = 0x10000, scoped, tag = 'input window, operand 0, single buffered']
    #allocation3 [shape = 's32[1]{0}', space=sflag, size = 0x4, scoped, tag = 'scoped memory for tpu_custom_call.1']
    #allocation4 [shape = 'u8[16384]{0}', space=vmem, size = 0x4000, scoped, tag = 'input window, operand 1, single buffered']
    #allocation5 [shape = 's32[1]{0}', space=sflag, size = 0x4, scoped, tag = 'scoped memory for tpu_custom_call.1']
    #allocation6 [shape = 'u8[65536]{0}', space=vmem, size = 0x10000, scoped, tag = 'output window, operand 0, single buffered']
    %15 = vsyncpa [#allocation3], 0
    %16 = vsyncpa [#allocation5], 0
    // Predicated region
    $region2: #{tpu_custom_call.1} parent=1 // pred_check
      _
    $region3: #{tpu_custom_call.1} parent=1 // pred_check_branch
      %18 = sbr.rel (0) target = $region5
    $region4: #{tpu_custom_call.1} parent=1 // pred_region
      %s20 = ssub.s32 2048, 256
      %21 = vsyncadd [#allocation3], %s20
      %s22 = sshll.u32 [#allocation2], 4
      %s23 = int_to_ptr.vmem [resolvable:$true] %s22
      %28 = dma.hbm_to_vmem [thread:$0]  %s0, 256, %s23, [#allocation3], 128, 128, 8
    $region5: #{tpu_custom_call.1} parent=1 // pred_fallthru
      _
    // Predicated region
    $region6: #{tpu_custom_call.1} parent=1 // pred_check
      _
    $region7: #{tpu_custom_call.1} parent=1 // pred_check_branch
      %30 = sbr.rel (0) target = $region9
    $region8: #{tpu_custom_call.1} parent=1 // pred_region
      %s32 = ssub.s32 512, 512
      %33 = vsyncadd [#allocation5], %s32
      %s34 = sshll.u32 [#allocation4], 4
      %s35 = int_to_ptr.vmem [resolvable:$true] %s34
      %40 = dma.hbm_to_vmem [thread:$0]  %s1, 512, %s35, [#allocation5], 128, 128, 8
    $region9: #{tpu_custom_call.1} parent=1 // pred_fallthru
      _
    // Predicated region
    $region10: #{tpu_custom_call.1} parent=1 // pred_check
      _
    $region11: #{tpu_custom_call.1} parent=1 // pred_check_branch
      %42 = sbr.rel (0) target = $region13
    $region12: #{tpu_custom_call.1} parent=1 // pred_region
      _
    $region13: #{tpu_custom_call.1} parent=1 // pred_fallthru
      _
    // Predicated region
    $region14: #{tpu_custom_call.1} parent=1 // pred_check
      _
    $region15: #{tpu_custom_call.1} parent=1 // pred_check_branch
      %44 = sbr.rel (0) target = $region17
    $region16: #{tpu_custom_call.1} parent=1 // pred_region
      _
    $region17: #{tpu_custom_call.1} parent=1 // pred_fallthru
      _
    // Predicated region
    $region18: #{tpu_custom_call.1} parent=1 // pred_check
      _
    $region19: #{tpu_custom_call.1} parent=1 // pred_check_branch
      %46 = sbr.rel (0) target = $region21
    $region20: #{tpu_custom_call.1} parent=1 // pred_region
      _
    $region21: #{tpu_custom_call.1} parent=1 // pred_fallthru
      _
    // Predicated region
    $region22: #{tpu_custom_call.1} parent=1 // pred_check
      _
    $region23: #{tpu_custom_call.1} parent=1 // pred_check_branch
      %48 = sbr.rel (0) target = $region25
    $region24: #{tpu_custom_call.1} parent=1 // pred_region
      _
    $region25: #{tpu_custom_call.1} parent=1 // pred_fallthru
      _
    // Predicated region
    $region26: #{tpu_custom_call.1} parent=1 // pred_check
      _
    $region27: #{tpu_custom_call.1} parent=1 // pred_check_branch
      %50 = sbr.rel (0) target = $region29
    $region28: #{tpu_custom_call.1} parent=1 // pred_region
      _
    $region29: #{tpu_custom_call.1} parent=1 // pred_fallthru
      _
    // Predicated region
    $region30: #{tpu_custom_call.1} parent=1 // pred_check
      _
    $region31: #{tpu_custom_call.1} parent=1 // pred_check_branch
      %52 = sbr.rel (0) target = $region33
    $region32: #{tpu_custom_call.1} parent=1 // pred_region
      _
    $region33: #{tpu_custom_call.1} parent=1 // pred_fallthru
      _
    // Predicated region
    $region34: #{tpu_custom_call.1} parent=1 // pred_check
      _
    $region35: #{tpu_custom_call.1} parent=1 // pred_check_branch
      %54 = sbr.rel (0) target = $region37
    $region36: #{tpu_custom_call.1} parent=1 // pred_region
      _
    $region37: #{tpu_custom_call.1} parent=1 // pred_fallthru
      _
    // Predicated region
    $region38: #{tpu_custom_call.1} parent=1 // pred_check
      _
    $region39: #{tpu_custom_call.1} parent=1 // pred_check_branch
      %56 = sbr.rel (0) target = $region41
    $region40: #{tpu_custom_call.1} parent=1 // pred_region
      _
    $region41: #{tpu_custom_call.1} parent=1 // pred_fallthru
      _
    // Predicated region
    $region42: #{tpu_custom_call.1} parent=1 // pred_check
      _
    $region43: #{tpu_custom_call.1} parent=1 // pred_check_branch
      %58 = sbr.rel (0) target = $region45
    $region44: #{tpu_custom_call.1} parent=1 // pred_region
      %59 = dma.done [#allocation3], 2048
    $region45: #{tpu_custom_call.1} parent=1 // pred_fallthru
      _
    // Predicated region
    $region46: #{tpu_custom_call.1} parent=1 // pred_check
      _
    $region47: #{tpu_custom_call.1} parent=1 // pred_check_branch
      %61 = sbr.rel (0) target = $region49
    $region48: #{tpu_custom_call.1} parent=1 // pred_region
      %62 = dma.done [#allocation5], 512
    $region49: #{tpu_custom_call.1} parent=1 // pred_fallthru
      _
    %v64 = vld [vmem:[#allocation2] sm:$0xff]
    %v65 = vld [vmem:[#allocation2 + $0x8] sm:$0xff]
    %v66 = vld [vmem:[#allocation2 + $0x10] sm:$0xff]
    %v67 = vld [vmem:[#allocation2 + $0x18] sm:$0xff]
    %v68 = vld [vmem:[#allocation2 + $0x20] sm:$0xff]
    %v69 = vld [vmem:[#allocation2 + $0x28] sm:$0xff]
    %v70 = vld [vmem:[#allocation2 + $0x30] sm:$0xff]
    %v71 = vld [vmem:[#allocation2 + $0x38] sm:$0xff]
    %v72 = vld [vmem:[#allocation2 + $0x40] sm:$0xff]
    %v73 = vld [vmem:[#allocation2 + $0x48] sm:$0xff]
    %v74 = vld [vmem:[#allocation2 + $0x50] sm:$0xff]
    %v75 = vld [vmem:[#allocation2 + $0x58] sm:$0xff]
    %v76 = vld [vmem:[#allocation2 + $0x60] sm:$0xff]
    %v77 = vld [vmem:[#allocation2 + $0x68] sm:$0xff]
    %v78 = vld [vmem:[#allocation2 + $0x70] sm:$0xff]
    %v79 = vld [vmem:[#allocation2 + $0x78] sm:$0xff]
    %v80 = vpack.c.bf16 %v65, %v64
    %v81 = vpack.c.bf16 %v67, %v66
    %v82 = vpack.c.bf16 %v69, %v68
    %v83 = vpack.c.bf16 %v71, %v70
    %v84 = vpack.c.bf16 %v73, %v72
    %v85 = vpack.c.bf16 %v75, %v74
    %v86 = vpack.c.bf16 %v77, %v76
    %v87 = vpack.c.bf16 %v79, %v78
    %v88 = vld [vmem:[#allocation4] sm:$0xff]
    %v89 = vld [vmem:[#allocation4 + $0x8] sm:$0xff]
    %v90 = vld [vmem:[#allocation4 + $0x10] sm:$0xff]
    %v91 = vld [vmem:[#allocation4 + $0x18] sm:$0xff]
    %v92 = vld [vmem:[%s2] sm:$0x3]
    %v94 = vlaneseq
    %v95 = vshrl.u32 %v94, 7
    %v96 = vsub.s32 0, %v95
    %v97 = vrot.slane %v92, %v96
    %v98 = vlaneseq
    %v99 = vshrl.u32 %v98, 7
    %v100 = vsub.s32 1, %v99
    %v101 = vrot.slane %v92, %v100
    %v108 = vunpack.c.l.b16 %v88
    %v109 = vunpack.c.h.b16 %v88
    %v110 = vunpack.c.l.b16 %v89
    %v111 = vunpack.c.h.b16 %v89
    %v112 = vunpack.c.l.b16 %v90
    %v113 = vunpack.c.h.b16 %v90
    %v114 = vunpack.c.l.b16 %v91
    %v115 = vunpack.c.h.b16 %v91
    %v116 = vpack.c.b16 %v110, %v108
    %v117 = vpack.c.b16 %v111, %v109
    %v118 = vpack.c.b16 %v114, %v112
    %v119 = vpack.c.b16 %v115, %v113
    %vm124 = vcmask 261120
    %v126 = vsel %vm124, %v80, 0
    %v129 = vsel %vm124, %v81, 0
    %v132 = vsel %vm124, %v82, 0
    %v135 = vsel %vm124, %v83, 0
    %v138 = vsel %vm124, %v84, 0
    %v141 = vsel %vm124, %v85, 0
    %v144 = vsel %vm124, %v86, 0
    %v147 = vsel %vm124, %v87, 0
    %149 = vmatprep.subr.bf16.mxu0 0
    %150 = vmatpush1.bf16.msra.mxu0 0
    %151 = vmatprep.subr.bf16.mxu0 0
    %152 = vmatpush1.bf16.msra.mxu0 0
    %153 = vmatprep.subr.bf16.mxu0 0
    %154 = vmatpush1.bf16.msra.mxu0 0
    %155 = vmatprep.subr.bf16.mxu0 0
    %156 = vmatpush1.bf16.msra.mxu0 0
    %157 = vmatprep.subr.bf16.mxu0 0
    %158 = vmatpush1.bf16.msra.mxu0 0
    %159 = vmatprep.subr.bf16.mxu0 0
    %160 = vmatpush1.bf16.msra.mxu0 0
    %161 = vmatprep.subr.bf16.mxu0 %v119
    %162 = vmatpush1.bf16.msra.mxu0 %v118
    %163 = vmatprep.subr.bf16.mxu0 %v117
    %164 = vmatpush1.bf16.msra.mxu0 %v116
    %165 = vmatprep.subr.bf16.mxu0 0
    %166 = vmatpush2.bf16.msra.mxu0 0
    %167 = vmatprep.subr.bf16.mxu0 0
    %168 = vmatpush2.bf16.msra.mxu0 0
    %169 = vmatprep.subr.bf16.mxu0 0
    %170 = vmatpush2.bf16.msra.mxu0 0
    %171 = vmatprep.subr.bf16.mxu0 0
    %172 = vmatpush2.bf16.msra.mxu0 0
    %173 = vmatprep.subr.bf16.mxu0 0
    %174 = vmatpush2.bf16.msra.mxu0 0
    %175 = vmatprep.subr.bf16.mxu0 0
    %176 = vmatpush2.bf16.msra.mxu0 0
    %177 = vmatprep.subr.bf16.mxu0 0
    %178 = vmatpush2.bf16.msra.mxu0 0
    %179 = vmatprep.subr.bf16.mxu0 0
    %180 = vmatpush2.bf16.msra.mxu0 0
    %181 = vmatprep.mubr.bf16.mxu0 0
    %182 = vmatmul.mubr.bf16.gmra.mxu0 %v126
    %v183 = vpop.f32.mrf.mxu0
    %v184 = vadd.f32 %v97, %v183
    %v185 = vpop.f32.mrf.mxu0
    %v186 = vadd.f32 %v101, %v185
    %v187 = vpop.f32.mrf.mxu0
    %v188 = vadd.f32 %v97, %v187
    %v189 = vpop.f32.mrf.mxu0
    %v190 = vadd.f32 %v101, %v189
    %191 = vmatprep.mubr.bf16.mxu0 0
    %192 = vmatmul.mubr.bf16.gmra.mxu0 %v129
    %v193 = vpop.f32.mrf.mxu0
    %v194 = vadd.f32 %v97, %v193
    %v195 = vpop.f32.mrf.mxu0
    %v196 = vadd.f32 %v101, %v195
    %v197 = vpop.f32.mrf.mxu0
    %v198 = vadd.f32 %v97, %v197
    %v199 = vpop.f32.mrf.mxu0
    %v200 = vadd.f32 %v101, %v199
    %201 = vmatprep.mubr.bf16.mxu0 0
    %202 = vmatmul.mubr.bf16.gmra.mxu0 %v132
    %v203 = vpop.f32.mrf.mxu0
    %v204 = vadd.f32 %v97, %v203
    %v205 = vpop.f32.mrf.mxu0
    %v206 = vadd.f32 %v101, %v205
    %v207 = vpop.f32.mrf.mxu0
    %v208 = vadd.f32 %v97, %v207
    %v209 = vpop.f32.mrf.mxu0
    %v210 = vadd.f32 %v101, %v209
    %211 = vmatprep.mubr.bf16.mxu0 0
    %212 = vmatmul.mubr.bf16.gmra.mxu0 %v135
    %v213 = vpop.f32.mrf.mxu0
    %v214 = vadd.f32 %v97, %v213
    %v215 = vpop.f32.mrf.mxu0
    %v216 = vadd.f32 %v101, %v215
    %v217 = vpop.f32.mrf.mxu0
    %v218 = vadd.f32 %v97, %v217
    %v219 = vpop.f32.mrf.mxu0
    %v220 = vadd.f32 %v101, %v219
    %221 = vmatprep.mubr.bf16.mxu0 0
    %222 = vmatmul.mubr.bf16.gmra.mxu0 %v138
    %v223 = vpop.f32.mrf.mxu0
    %v224 = vadd.f32 %v97, %v223
    %v225 = vpop.f32.mrf.mxu0
    %v226 = vadd.f32 %v101, %v225
    %v227 = vpop.f32.mrf.mxu0
    %v228 = vadd.f32 %v97, %v227
    %v229 = vpop.f32.mrf.mxu0
    %v230 = vadd.f32 %v101, %v229
    %231 = vmatprep.mubr.bf16.mxu0 0
    %232 = vmatmul.mubr.bf16.gmra.mxu0 %v141
    %v233 = vpop.f32.mrf.mxu0
    %v234 = vadd.f32 %v97, %v233
    %v235 = vpop.f32.mrf.mxu0
    %v236 = vadd.f32 %v101, %v235
    %v237 = vpop.f32.mrf.mxu0
    %v238 = vadd.f32 %v97, %v237
    %v239 = vpop.f32.mrf.mxu0
    %v240 = vadd.f32 %v101, %v239
    %241 = vmatprep.mubr.bf16.mxu0 0
    %242 = vmatmul.mubr.bf16.gmra.mxu0 %v144
    %v243 = vpop.f32.mrf.mxu0
    %v244 = vadd.f32 %v97, %v243
    %v245 = vpop.f32.mrf.mxu0
    %v246 = vadd.f32 %v101, %v245
    %v247 = vpop.f32.mrf.mxu0
    %v248 = vadd.f32 %v97, %v247
    %v249 = vpop.f32.mrf.mxu0
    %v250 = vadd.f32 %v101, %v249
    %251 = vmatprep.mubr.bf16.mxu0 0
    %252 = vmatmul.mubr.bf16.gmra.mxu0 %v147
    %v253 = vpop.f32.mrf.mxu0
    %v254 = vadd.f32 %v97, %v253
    %v255 = vpop.f32.mrf.mxu0
    %v256 = vadd.f32 %v101, %v255
    %v257 = vpop.f32.mrf.mxu0
    %v258 = vadd.f32 %v97, %v257
    %v259 = vpop.f32.mrf.mxu0
    %v260 = vadd.f32 %v101, %v259
    %261 = vdwg.mxu0
    %v262 = vld [vmem:[%s3] sm:$0x3]
    %v263 = vld [vmem:[%s4] sm:$0x3]
    %v264 = vadd.f32 %v184, %v186
    %265 = vadd.xlane.f32.xlu0 %v264
    %v266 = vpop.xlane.xlu0 %265
    %v267 = vadd.f32 %v188, %v190
    %268 = vadd.xlane.f32.xlu0 %v267
    %v269 = vpop.xlane.xlu0 %268
    %v270 = vadd.f32 %v194, %v196
    %271 = vadd.xlane.f32.xlu0 %v270
    %v272 = vpop.xlane.xlu0 %271
    %v273 = vadd.f32 %v198, %v200
    %274 = vadd.xlane.f32.xlu0 %v273
    %v275 = vpop.xlane.xlu0 %274
    %v276 = vadd.f32 %v204, %v206
    %277 = vadd.xlane.f32.xlu0 %v276
    %v278 = vpop.xlane.xlu0 %277
    %v279 = vadd.f32 %v208, %v210
    %280 = vadd.xlane.f32.xlu0 %v279
    %v281 = vpop.xlane.xlu0 %280
    %v282 = vadd.f32 %v214, %v216
    %283 = vadd.xlane.f32.xlu0 %v282
    %v284 = vpop.xlane.xlu0 %283
    %v285 = vadd.f32 %v218, %v220
    %286 = vadd.xlane.f32.xlu0 %v285
    %v287 = vpop.xlane.xlu0 %286
    %v288 = vadd.f32 %v224, %v226
    %289 = vadd.xlane.f32.xlu0 %v288
    %v290 = vpop.xlane.xlu0 %289
    %v291 = vadd.f32 %v228, %v230
    %292 = vadd.xlane.f32.xlu0 %v291
    %v293 = vpop.xlane.xlu0 %292
    %v294 = vadd.f32 %v234, %v236
    %295 = vadd.xlane.f32.xlu0 %v294
    %v296 = vpop.xlane.xlu0 %295
    %v297 = vadd.f32 %v238, %v240
    %298 = vadd.xlane.f32.xlu0 %v297
    %v299 = vpop.xlane.xlu0 %298
    %v300 = vadd.f32 %v244, %v246
    %301 = vadd.xlane.f32.xlu0 %v300
    %v302 = vpop.xlane.xlu0 %301
    %v303 = vadd.f32 %v248, %v250
    %304 = vadd.xlane.f32.xlu0 %v303
    %v305 = vpop.xlane.xlu0 %304
    %v306 = vadd.f32 %v254, %v256
    %307 = vadd.xlane.f32.xlu0 %v306
    %v308 = vpop.xlane.xlu0 %307
    %v309 = vadd.f32 %v258, %v260
    %310 = vadd.xlane.f32.xlu0 %v309
    %v311 = vpop.xlane.xlu0 %310
    %v312 = vmul.f32 %v266, 0.00390625
    %v313 = vmul.f32 %v269, 0.00390625
    %v314 = vmul.f32 %v272, 0.00390625
    %v315 = vmul.f32 %v275, 0.00390625
    %v316 = vmul.f32 %v278, 0.00390625
    %v317 = vmul.f32 %v281, 0.00390625
    %v318 = vmul.f32 %v284, 0.00390625
    %v319 = vmul.f32 %v287, 0.00390625
    %v320 = vmul.f32 %v290, 0.00390625
    %v321 = vmul.f32 %v293, 0.00390625
    %v322 = vmul.f32 %v296, 0.00390625
    %v323 = vmul.f32 %v299, 0.00390625
    %v324 = vmul.f32 %v302, 0.00390625
    %v325 = vmul.f32 %v305, 0.00390625
    %v326 = vmul.f32 %v308, 0.00390625
    %v327 = vmul.f32 %v311, 0.00390625
    %v328 = vsub.f32 %v184, %v312
    %v329 = vsub.f32 %v186, %v312
    %v330 = vsub.f32 %v188, %v313
    %v331 = vsub.f32 %v190, %v313
    %v332 = vsub.f32 %v194, %v314
    %v333 = vsub.f32 %v196, %v314
    %v334 = vsub.f32 %v198, %v315
    %v335 = vsub.f32 %v200, %v315
    %v336 = vsub.f32 %v204, %v316
    %v337 = vsub.f32 %v206, %v316
    %v338 = vsub.f32 %v208, %v317
    %v339 = vsub.f32 %v210, %v317
    %v340 = vsub.f32 %v214, %v318
    %v341 = vsub.f32 %v216, %v318
    %v342 = vsub.f32 %v218, %v319
    %v343 = vsub.f32 %v220, %v319
    %v344 = vsub.f32 %v224, %v320
    %v345 = vsub.f32 %v226, %v320
    %v346 = vsub.f32 %v228, %v321
    %v347 = vsub.f32 %v230, %v321
    %v348 = vsub.f32 %v234, %v322
    %v349 = vsub.f32 %v236, %v322
    %v350 = vsub.f32 %v238, %v323
    %v351 = vsub.f32 %v240, %v323
    %v352 = vsub.f32 %v244, %v324
    %v353 = vsub.f32 %v246, %v324
    %v354 = vsub.f32 %v248, %v325
    %v355 = vsub.f32 %v250, %v325
    %v356 = vsub.f32 %v254, %v326
    %v357 = vsub.f32 %v256, %v326
    %v358 = vsub.f32 %v258, %v327
    %v359 = vsub.f32 %v260, %v327
    %v360 = vmul.f32 %v328, %v328
    %v361 = vmul.f32 %v329, %v329
    %v362 = vmul.f32 %v330, %v330
    %v363 = vmul.f32 %v331, %v331
    %v364 = vmul.f32 %v332, %v332
    %v365 = vmul.f32 %v333, %v333
    %v366 = vmul.f32 %v334, %v334
    %v367 = vmul.f32 %v335, %v335
    %v368 = vmul.f32 %v336, %v336
    %v369 = vmul.f32 %v337, %v337
    %v370 = vmul.f32 %v338, %v338
    %v371 = vmul.f32 %v339, %v339
    %v372 = vmul.f32 %v340, %v340
    %v373 = vmul.f32 %v341, %v341
    %v374 = vmul.f32 %v342, %v342
    %v375 = vmul.f32 %v343, %v343
    %v376 = vmul.f32 %v344, %v344
    %v377 = vmul.f32 %v345, %v345
    %v378 = vmul.f32 %v346, %v346
    %v379 = vmul.f32 %v347, %v347
    %v380 = vmul.f32 %v348, %v348
    %v381 = vmul.f32 %v349, %v349
    %v382 = vmul.f32 %v350, %v350
    %v383 = vmul.f32 %v351, %v351
    %v384 = vmul.f32 %v352, %v352
    %v385 = vmul.f32 %v353, %v353
    %v386 = vmul.f32 %v354, %v354
    %v387 = vmul.f32 %v355, %v355
    %v388 = vmul.f32 %v356, %v356
    %v389 = vmul.f32 %v357, %v357
    %v390 = vmul.f32 %v358, %v358
    %v391 = vmul.f32 %v359, %v359
    %v392 = vadd.f32 %v360, %v361
    %393 = vadd.xlane.f32.xlu0 %v392
    %v394 = vpop.xlane.xlu0 %393
    %v395 = vadd.f32 %v362, %v363
    %396 = vadd.xlane.f32.xlu0 %v395
    %v397 = vpop.xlane.xlu0 %396
    %v398 = vadd.f32 %v364, %v365
    %399 = vadd.xlane.f32.xlu0 %v398
    %v400 = vpop.xlane.xlu0 %399
    %v401 = vadd.f32 %v366, %v367
    %402 = vadd.xlane.f32.xlu0 %v401
    %v403 = vpop.xlane.xlu0 %402
    %v404 = vadd.f32 %v368, %v369
    %405 = vadd.xlane.f32.xlu0 %v404
    %v406 = vpop.xlane.xlu0 %405
    %v407 = vadd.f32 %v370, %v371
    %408 = vadd.xlane.f32.xlu0 %v407
    %v409 = vpop.xlane.xlu0 %408
    %v410 = vadd.f32 %v372, %v373
    %411 = vadd.xlane.f32.xlu0 %v410
    %v412 = vpop.xlane.xlu0 %411
    %v413 = vadd.f32 %v374, %v375
    %414 = vadd.xlane.f32.xlu0 %v413
    %v415 = vpop.xlane.xlu0 %414
    %v416 = vadd.f32 %v376, %v377
    %417 = vadd.xlane.f32.xlu0 %v416
    %v418 = vpop.xlane.xlu0 %417
    %v419 = vadd.f32 %v378, %v379
    %420 = vadd.xlane.f32.xlu0 %v419
    %v421 = vpop.xlane.xlu0 %420
    %v422 = vadd.f32 %v380, %v381
    %423 = vadd.xlane.f32.xlu0 %v422
    %v424 = vpop.xlane.xlu0 %423
    %v425 = vadd.f32 %v382, %v383
    %426 = vadd.xlane.f32.xlu0 %v425
    %v427 = vpop.xlane.xlu0 %426
    %v428 = vadd.f32 %v384, %v385
    %429 = vadd.xlane.f32.xlu0 %v428
    %v430 = vpop.xlane.xlu0 %429
    %v431 = vadd.f32 %v386, %v387
    %432 = vadd.xlane.f32.xlu0 %v431
    %v433 = vpop.xlane.xlu0 %432
    %v434 = vadd.f32 %v388, %v389
    %435 = vadd.xlane.f32.xlu0 %v434
    %v436 = vpop.xlane.xlu0 %435
    %v437 = vadd.f32 %v390, %v391
    %438 = vadd.xlane.f32.xlu0 %v437
    %v439 = vpop.xlane.xlu0 %438
    %v440 = vmul.f32 %v394, 0.00390625
    %v441 = vmul.f32 %v397, 0.00390625
    %v442 = vmul.f32 %v400, 0.00390625
    %v443 = vmul.f32 %v403, 0.00390625
    %v444 = vmul.f32 %v406, 0.00390625
    %v445 = vmul.f32 %v409, 0.00390625
    %v446 = vmul.f32 %v412, 0.00390625
    %v447 = vmul.f32 %v415, 0.00390625
    %v448 = vmul.f32 %v418, 0.00390625
    %v449 = vmul.f32 %v421, 0.00390625
    %v450 = vmul.f32 %v424, 0.00390625
    %v451 = vmul.f32 %v427, 0.00390625
    %v452 = vmul.f32 %v430, 0.00390625
    %v453 = vmul.f32 %v433, 0.00390625
    %v454 = vmul.f32 %v436, 0.00390625
    %v455 = vmul.f32 %v439, 0.00390625
    %v456 = vadd.f32 %v440, 1e-05
    %v457 = vadd.f32 %v441, 1e-05
    %v458 = vadd.f32 %v442, 1e-05
    %v459 = vadd.f32 %v443, 1e-05
    %v460 = vadd.f32 %v444, 1e-05
    %v461 = vadd.f32 %v445, 1e-05
    %v462 = vadd.f32 %v446, 1e-05
    %v463 = vadd.f32 %v447, 1e-05
    %v464 = vadd.f32 %v448, 1e-05
    %v465 = vadd.f32 %v449, 1e-05
    %v466 = vadd.f32 %v450, 1e-05
    %v467 = vadd.f32 %v451, 1e-05
    %v468 = vadd.f32 %v452, 1e-05
    %v469 = vadd.f32 %v453, 1e-05
    %v470 = vadd.f32 %v454, 1e-05
    %v471 = vadd.f32 %v455, 1e-05
    %v472 = vrsqrt.pop %v456
    %v473 = vrsqrt.pop %v457
    %v474 = vrsqrt.pop %v458
    %v475 = vrsqrt.pop %v459
    %v476 = vrsqrt.pop %v460
    %v477 = vrsqrt.pop %v461
    %v478 = vrsqrt.pop %v462
    %v479 = vrsqrt.pop %v463
    %v480 = vrsqrt.pop %v464
    %v481 = vrsqrt.pop %v465
    %v482 = vrsqrt.pop %v466
    %v483 = vrsqrt.pop %v467
    %v484 = vrsqrt.pop %v468
    %v485 = vrsqrt.pop %v469
    %v486 = vrsqrt.pop %v470
    %v487 = vrsqrt.pop %v471
    %v489 = vlaneseq
    %v490 = vshrl.u32 %v489, 7
    %v491 = vsub.s32 0, %v490
    %v492 = vrot.slane %v262, %v491
    %v493 = vlaneseq
    %v494 = vshrl.u32 %v493, 7
    %v495 = vsub.s32 1, %v494
    %v496 = vrot.slane %v262, %v495
    %v499 = vmul.f32 %v472, %v492
    %v500 = vmul.f32 %v472, %v496
    %v501 = vmul.f32 %v473, %v492
    %v502 = vmul.f32 %v473, %v496
    %v503 = vmul.f32 %v474, %v492
    %v504 = vmul.f32 %v474, %v496
    %v505 = vmul.f32 %v475, %v492
    %v506 = vmul.f32 %v475, %v496
    %v507 = vmul.f32 %v476, %v492
    %v508 = vmul.f32 %v476, %v496
    %v509 = vmul.f32 %v477, %v492
    %v510 = vmul.f32 %v477, %v496
    %v511 = vmul.f32 %v478, %v492
    %v512 = vmul.f32 %v478, %v496
    %v513 = vmul.f32 %v479, %v492
    %v514 = vmul.f32 %v479, %v496
    %v515 = vmul.f32 %v480, %v492
    %v516 = vmul.f32 %v480, %v496
    %v517 = vmul.f32 %v481, %v492
    %v518 = vmul.f32 %v481, %v496
    %v519 = vmul.f32 %v482, %v492
    %v520 = vmul.f32 %v482, %v496
    %v521 = vmul.f32 %v483, %v492
    %v522 = vmul.f32 %v483, %v496
    %v523 = vmul.f32 %v484, %v492
    %v524 = vmul.f32 %v484, %v496
    %v525 = vmul.f32 %v485, %v492
    %v526 = vmul.f32 %v485, %v496
    %v527 = vmul.f32 %v486, %v492
    %v528 = vmul.f32 %v486, %v496
    %v529 = vmul.f32 %v487, %v492
    %v530 = vmul.f32 %v487, %v496
    %v531 = vmul.f32 %v328, %v499
    %v532 = vmul.f32 %v329, %v500
    %v533 = vmul.f32 %v330, %v501
    %v534 = vmul.f32 %v331, %v502
    %v535 = vmul.f32 %v332, %v503
    %v536 = vmul.f32 %v333, %v504
    %v537 = vmul.f32 %v334, %v505
    %v538 = vmul.f32 %v335, %v506
    %v539 = vmul.f32 %v336, %v507
    %v540 = vmul.f32 %v337, %v508
    %v541 = vmul.f32 %v338, %v509
    %v542 = vmul.f32 %v339, %v510
    %v543 = vmul.f32 %v340, %v511
    %v544 = vmul.f32 %v341, %v512
    %v545 = vmul.f32 %v342, %v513
    %v546 = vmul.f32 %v343, %v514
    %v547 = vmul.f32 %v344, %v515
    %v548 = vmul.f32 %v345, %v516
    %v549 = vmul.f32 %v346, %v517
    %v550 = vmul.f32 %v347, %v518
    %v551 = vmul.f32 %v348, %v519
    %v552 = vmul.f32 %v349, %v520
    %v553 = vmul.f32 %v350, %v521
    %v554 = vmul.f32 %v351, %v522
    %v555 = vmul.f32 %v352, %v523
    %v556 = vmul.f32 %v353, %v524
    %v557 = vmul.f32 %v354, %v525
    %v558 = vmul.f32 %v355, %v526
    %v559 = vmul.f32 %v356, %v527
    %v560 = vmul.f32 %v357, %v528
    %v561 = vmul.f32 %v358, %v529
    %v562 = vmul.f32 %v359, %v530
    %v564 = vlaneseq
    %v565 = vshrl.u32 %v564, 7
    %v566 = vsub.s32 0, %v565
    %v567 = vrot.slane %v263, %v566
    %v568 = vlaneseq
    %v569 = vshrl.u32 %v568, 7
    %v570 = vsub.s32 1, %v569
    %v571 = vrot.slane %v263, %v570
    %v574 = vadd.f32 %v531, %v567
    %v575 = vadd.f32 %v532, %v571
    %v576 = vadd.f32 %v533, %v567
    %v577 = vadd.f32 %v534, %v571
    %v578 = vadd.f32 %v535, %v567
    %v579 = vadd.f32 %v536, %v571
    %v580 = vadd.f32 %v537, %v567
    %v581 = vadd.f32 %v538, %v571
    %v582 = vadd.f32 %v539, %v567
    %v583 = vadd.f32 %v540, %v571
    %v584 = vadd.f32 %v541, %v567
    %v585 = vadd.f32 %v542, %v571
    %v586 = vadd.f32 %v543, %v567
    %v587 = vadd.f32 %v544, %v571
    %v588 = vadd.f32 %v545, %v567
    %v589 = vadd.f32 %v546, %v571
    %v590 = vadd.f32 %v547, %v567
    %v591 = vadd.f32 %v548, %v571
    %v592 = vadd.f32 %v549, %v567
    %v593 = vadd.f32 %v550, %v571
    %v594 = vadd.f32 %v551, %v567
    %v595 = vadd.f32 %v552, %v571
    %v596 = vadd.f32 %v553, %v567
    %v597 = vadd.f32 %v554, %v571
    %v598 = vadd.f32 %v555, %v567
    %v599 = vadd.f32 %v556, %v571
    %v600 = vadd.f32 %v557, %v567
    %v601 = vadd.f32 %v558, %v571
    %v602 = vadd.f32 %v559, %v567
    %v603 = vadd.f32 %v560, %v571
    %v604 = vadd.f32 %v561, %v567
    %v605 = vadd.f32 %v562, %v571
    %v606 = vmax.f32 %v574, 0.0
    %v607 = vmax.f32 %v575, 0.0
    %v608 = vmax.f32 %v576, 0.0
    %v609 = vmax.f32 %v577, 0.0
    %v610 = vmax.f32 %v578, 0.0
    %v611 = vmax.f32 %v579, 0.0
    %v612 = vmax.f32 %v580, 0.0
    %v613 = vmax.f32 %v581, 0.0
    %v614 = vmax.f32 %v582, 0.0
    %v615 = vmax.f32 %v583, 0.0
    %v616 = vmax.f32 %v584, 0.0
    %v617 = vmax.f32 %v585, 0.0
    %v618 = vmax.f32 %v586, 0.0
    %v619 = vmax.f32 %v587, 0.0
    %v620 = vmax.f32 %v588, 0.0
    %v621 = vmax.f32 %v589, 0.0
    %v622 = vmax.f32 %v590, 0.0
    %v623 = vmax.f32 %v591, 0.0
    %v624 = vmax.f32 %v592, 0.0
    %v625 = vmax.f32 %v593, 0.0
    %v626 = vmax.f32 %v594, 0.0
    %v627 = vmax.f32 %v595, 0.0
    %v628 = vmax.f32 %v596, 0.0
    %v629 = vmax.f32 %v597, 0.0
    %v630 = vmax.f32 %v598, 0.0
    %v631 = vmax.f32 %v599, 0.0
    %v632 = vmax.f32 %v600, 0.0
    %v633 = vmax.f32 %v601, 0.0
    %v634 = vmax.f32 %v602, 0.0
    %v635 = vmax.f32 %v603, 0.0
    %v636 = vmax.f32 %v604, 0.0
    %v637 = vmax.f32 %v605, 0.0
    %v638 = vpack.c.bf16 %v608, %v606
    %v639 = vpack.c.bf16 %v609, %v607
    %v640 = vpack.c.bf16 %v612, %v610
    %v641 = vpack.c.bf16 %v613, %v611
    %v642 = vpack.c.bf16 %v616, %v614
    %v643 = vpack.c.bf16 %v617, %v615
    %v644 = vpack.c.bf16 %v620, %v618
    %v645 = vpack.c.bf16 %v621, %v619
    %v646 = vpack.c.bf16 %v624, %v622
    %v647 = vpack.c.bf16 %v625, %v623
    %v648 = vpack.c.bf16 %v628, %v626
    %v649 = vpack.c.bf16 %v629, %v627
    %v650 = vpack.c.bf16 %v632, %v630
    %v651 = vpack.c.bf16 %v633, %v631
    %v652 = vpack.c.bf16 %v636, %v634
    %v653 = vpack.c.bf16 %v637, %v635
    %v654 = vld [vmem:[%s5] sm:$0xf]
    %v655 = vld [vmem:[%s5 + $0x4] sm:$0xf]
    %v656 = vld [vmem:[%s5 + $0x8] sm:$0xf]
    %v657 = vld [vmem:[%s5 + $0xc] sm:$0xf]
    %v658 = vld [vmem:[%s5 + $0x10] sm:$0xf]
    %v659 = vld [vmem:[%s5 + $0x14] sm:$0xf]
    %v660 = vld [vmem:[%s5 + $0x18] sm:$0xf]
    %v661 = vld [vmem:[%s5 + $0x1c] sm:$0xf]
    %v662 = vld [vmem:[%s5 + $0x20] sm:$0xf]
    %v663 = vld [vmem:[%s5 + $0x24] sm:$0xf]
    %v664 = vld [vmem:[%s5 + $0x28] sm:$0xf]
    %v665 = vld [vmem:[%s5 + $0x2c] sm:$0xf]
    %v666 = vld [vmem:[%s5 + $0x30] sm:$0xf]
    %v667 = vld [vmem:[%s5 + $0x34] sm:$0xf]
    %v668 = vld [vmem:[%s5 + $0x38] sm:$0xf]
    %v669 = vld [vmem:[%s5 + $0x3c] sm:$0xf]
    %v670 = vld [vmem:[%s5 + $0x40] sm:$0xf]
    %v671 = vld [vmem:[%s5 + $0x44] sm:$0xf]
    %v672 = vld [vmem:[%s5 + $0x48] sm:$0xf]
    %v673 = vld [vmem:[%s5 + $0x4c] sm:$0xf]
    %v674 = vld [vmem:[%s5 + $0x50] sm:$0xf]
    %v675 = vld [vmem:[%s5 + $0x54] sm:$0xf]
    %v676 = vld [vmem:[%s5 + $0x58] sm:$0xf]
    %v677 = vld [vmem:[%s5 + $0x5c] sm:$0xf]
    %v678 = vld [vmem:[%s5 + $0x60] sm:$0xf]
    %v679 = vld [vmem:[%s5 + $0x64] sm:$0xf]
    %v680 = vld [vmem:[%s5 + $0x68] sm:$0xf]
    %v681 = vld [vmem:[%s5 + $0x6c] sm:$0xf]
    %v682 = vld [vmem:[%s5 + $0x70] sm:$0xf]
    %v683 = vld [vmem:[%s5 + $0x74] sm:$0xf]
    %v684 = vld [vmem:[%s5 + $0x78] sm:$0xf]
    %v685 = vld [vmem:[%s5 + $0x7c] sm:$0xf]
    %v686 = vld [vmem:[%s6] sm:$0x1]
    %v688 = vlaneseq
    %v689 = vshrl.u32 %v688, 7
    %v690 = vsub.s32 0, %v689
    %v691 = vrot.slane %v686, %v690
    %v725 = vunpack.c.l.b16 %v654
    %v726 = vunpack.c.l.b16 %v655
    %v727 = vunpack.c.l.b16 %v656
    %v728 = vunpack.c.l.b16 %v657
    %v729 = vunpack.c.l.b16 %v658
    %v730 = vunpack.c.l.b16 %v659
    %v731 = vunpack.c.l.b16 %v660
    %v732 = vunpack.c.l.b16 %v661
    %v733 = vunpack.c.l.b16 %v662
    %v734 = vunpack.c.l.b16 %v663
    %v735 = vunpack.c.l.b16 %v664
    %v736 = vunpack.c.l.b16 %v665
    %v737 = vunpack.c.l.b16 %v666
    %v738 = vunpack.c.l.b16 %v667
    %v739 = vunpack.c.l.b16 %v668
    %v740 = vunpack.c.l.b16 %v669
    %v741 = vunpack.c.l.b16 %v670
    %v742 = vunpack.c.l.b16 %v671
    %v743 = vunpack.c.l.b16 %v672
    %v744 = vunpack.c.l.b16 %v673
    %v745 = vunpack.c.l.b16 %v674
    %v746 = vunpack.c.l.b16 %v675
    %v747 = vunpack.c.l.b16 %v676
    %v748 = vunpack.c.l.b16 %v677
    %v749 = vunpack.c.l.b16 %v678
    %v750 = vunpack.c.l.b16 %v679
    %v751 = vunpack.c.l.b16 %v680
    %v752 = vunpack.c.l.b16 %v681
    %v753 = vunpack.c.l.b16 %v682
    %v754 = vunpack.c.l.b16 %v683
    %v755 = vunpack.c.l.b16 %v684
    %v756 = vunpack.c.l.b16 %v685
    %v757 = vpack.c.b16 %v726, %v725
    %v758 = vpack.c.b16 %v728, %v727
    %v759 = vpack.c.b16 %v730, %v729
    %v760 = vpack.c.b16 %v732, %v731
    %v761 = vpack.c.b16 %v734, %v733
    %v762 = vpack.c.b16 %v736, %v735
    %v763 = vpack.c.b16 %v738, %v737
    %v764 = vpack.c.b16 %v740, %v739
    %v765 = vpack.c.b16 %v742, %v741
    %v766 = vpack.c.b16 %v744, %v743
    %v767 = vpack.c.b16 %v746, %v745
    %v768 = vpack.c.b16 %v748, %v747
    %v769 = vpack.c.b16 %v750, %v749
    %v770 = vpack.c.b16 %v752, %v751
    %v771 = vpack.c.b16 %v754, %v753
    %v772 = vpack.c.b16 %v756, %v755
    %789 = vmatprep.subr.bf16.mxu0 0
    %790 = vmatpush1.bf16.msra.mxu0 %v764
    %791 = vmatprep.subr.bf16.mxu0 0
    %792 = vmatpush1.bf16.msra.mxu0 %v763
    %793 = vmatprep.subr.bf16.mxu0 0
    %794 = vmatpush1.bf16.msra.mxu0 %v762
    %795 = vmatprep.subr.bf16.mxu0 0
    %796 = vmatpush1.bf16.msra.mxu0 %v761
    %797 = vmatprep.subr.bf16.mxu0 0
    %798 = vmatpush1.bf16.msra.mxu0 %v760
    %799 = vmatprep.subr.bf16.mxu0 0
    %800 = vmatpush1.bf16.msra.mxu0 %v759
    %801 = vmatprep.subr.bf16.mxu0 0
    %802 = vmatpush1.bf16.msra.mxu0 %v758
    %803 = vmatprep.subr.bf16.mxu0 0
    %804 = vmatpush1.bf16.msra.mxu0 %v757
    %805 = vmatprep.subr.bf16.mxu0 0
    %806 = vmatpush2.bf16.msra.mxu0 %v772
    %807 = vmatprep.subr.bf16.mxu0 0
    %808 = vmatpush2.bf16.msra.mxu0 %v771
    %809 = vmatprep.subr.bf16.mxu0 0
    %810 = vmatpush2.bf16.msra.mxu0 %v770
    %811 = vmatprep.subr.bf16.mxu0 0
    %812 = vmatpush2.bf16.msra.mxu0 %v769
    %813 = vmatprep.subr.bf16.mxu0 0
    %814 = vmatpush2.bf16.msra.mxu0 %v768
    %815 = vmatprep.subr.bf16.mxu0 0
    %816 = vmatpush2.bf16.msra.mxu0 %v767
    %817 = vmatprep.subr.bf16.mxu0 0
    %818 = vmatpush2.bf16.msra.mxu0 %v766
    %819 = vmatprep.subr.bf16.mxu0 0
    %820 = vmatpush2.bf16.msra.mxu0 %v765
    %821 = vmatprep.mubr.bf16.mxu0 %v639
    %822 = vmatmul.mubr.bf16.gmra.mxu0 %v638
    %v823 = vpop.f32.mrf.mxu0
    %v824 = vadd.f32 %v691, %v823
    %v825 = vpop.f32.mrf.mxu0
    %v826 = vpop.f32.mrf.mxu0
    %v827 = vadd.f32 %v691, %v826
    %v828 = vpop.f32.mrf.mxu0
    %829 = vmatprep.mubr.bf16.mxu0 %v641
    %830 = vmatmul.mubr.bf16.gmra.mxu0 %v640
    %v831 = vpop.f32.mrf.mxu0
    %v832 = vadd.f32 %v691, %v831
    %v833 = vpop.f32.mrf.mxu0
    %v834 = vpop.f32.mrf.mxu0
    %v835 = vadd.f32 %v691, %v834
    %v836 = vpop.f32.mrf.mxu0
    %837 = vmatprep.mubr.bf16.mxu0 %v643
    %838 = vmatmul.mubr.bf16.gmra.mxu0 %v642
    %v839 = vpop.f32.mrf.mxu0
    %v840 = vadd.f32 %v691, %v839
    %v841 = vpop.f32.mrf.mxu0
    %v842 = vpop.f32.mrf.mxu0
    %v843 = vadd.f32 %v691, %v842
    %v844 = vpop.f32.mrf.mxu0
    %845 = vmatprep.mubr.bf16.mxu0 %v645
    %846 = vmatmul.mubr.bf16.gmra.mxu0 %v644
    %v847 = vpop.f32.mrf.mxu0
    %v848 = vadd.f32 %v691, %v847
    %v849 = vpop.f32.mrf.mxu0
    %v850 = vpop.f32.mrf.mxu0
    %v851 = vadd.f32 %v691, %v850
    %v852 = vpop.f32.mrf.mxu0
    %853 = vmatprep.mubr.bf16.mxu0 %v647
    %854 = vmatmul.mubr.bf16.gmra.mxu0 %v646
    %v855 = vpop.f32.mrf.mxu0
    %v856 = vadd.f32 %v691, %v855
    %v857 = vpop.f32.mrf.mxu0
    %v858 = vpop.f32.mrf.mxu0
    %v859 = vadd.f32 %v691, %v858
    %v860 = vpop.f32.mrf.mxu0
    %861 = vmatprep.mubr.bf16.mxu0 %v649
    %862 = vmatmul.mubr.bf16.gmra.mxu0 %v648
    %v863 = vpop.f32.mrf.mxu0
    %v864 = vadd.f32 %v691, %v863
    %v865 = vpop.f32.mrf.mxu0
    %v866 = vpop.f32.mrf.mxu0
    %v867 = vadd.f32 %v691, %v866
    %v868 = vpop.f32.mrf.mxu0
    %869 = vmatprep.mubr.bf16.mxu0 %v651
    %870 = vmatmul.mubr.bf16.gmra.mxu0 %v650
    %v871 = vpop.f32.mrf.mxu0
    %v872 = vadd.f32 %v691, %v871
    %v873 = vpop.f32.mrf.mxu0
    %v874 = vpop.f32.mrf.mxu0
    %v875 = vadd.f32 %v691, %v874
    %v876 = vpop.f32.mrf.mxu0
    %877 = vmatprep.mubr.bf16.mxu0 %v653
    %878 = vmatmul.mubr.bf16.gmra.mxu0 %v652
    %v879 = vpop.f32.mrf.mxu0
    %v880 = vadd.f32 %v691, %v879
    %v881 = vpop.f32.mrf.mxu0
    %v882 = vpop.f32.mrf.mxu0
    %v883 = vadd.f32 %v691, %v882
    %v884 = vpop.f32.mrf.mxu0
    %885 = vdwg.mxu0
    %v886 = vld [vmem:[%s7] sm:$0x1]
    %v887 = vld [vmem:[%s8] sm:$0x1]
    %888 = vadd.xlane.f32.xlu0 %v824
    %v889 = vpop.xlane.xlu0 %888
    %890 = vadd.xlane.f32.xlu0 %v827
    %v891 = vpop.xlane.xlu0 %890
    %892 = vadd.xlane.f32.xlu0 %v832
    %v893 = vpop.xlane.xlu0 %892
    %894 = vadd.xlane.f32.xlu0 %v835
    %v895 = vpop.xlane.xlu0 %894
    %896 = vadd.xlane.f32.xlu0 %v840
    %v897 = vpop.xlane.xlu0 %896
    %898 = vadd.xlane.f32.xlu0 %v843
    %v899 = vpop.xlane.xlu0 %898
    %900 = vadd.xlane.f32.xlu0 %v848
    %v901 = vpop.xlane.xlu0 %900
    %902 = vadd.xlane.f32.xlu0 %v851
    %v903 = vpop.xlane.xlu0 %902
    %904 = vadd.xlane.f32.xlu0 %v856
    %v905 = vpop.xlane.xlu0 %904
    %906 = vadd.xlane.f32.xlu0 %v859
    %v907 = vpop.xlane.xlu0 %906
    %908 = vadd.xlane.f32.xlu0 %v864
    %v909 = vpop.xlane.xlu0 %908
    %910 = vadd.xlane.f32.xlu0 %v867
    %v911 = vpop.xlane.xlu0 %910
    %912 = vadd.xlane.f32.xlu0 %v872
    %v913 = vpop.xlane.xlu0 %912
    %914 = vadd.xlane.f32.xlu0 %v875
    %v915 = vpop.xlane.xlu0 %914
    %916 = vadd.xlane.f32.xlu0 %v880
    %v917 = vpop.xlane.xlu0 %916
    %918 = vadd.xlane.f32.xlu0 %v883
    %v919 = vpop.xlane.xlu0 %918
    %v920 = vmul.f32 %v889, 0.0078125
    %v921 = vmul.f32 %v891, 0.0078125
    %v922 = vmul.f32 %v893, 0.0078125
    %v923 = vmul.f32 %v895, 0.0078125
    %v924 = vmul.f32 %v897, 0.0078125
    %v925 = vmul.f32 %v899, 0.0078125
    %v926 = vmul.f32 %v901, 0.0078125
    %v927 = vmul.f32 %v903, 0.0078125
    %v928 = vmul.f32 %v905, 0.0078125
    %v929 = vmul.f32 %v907, 0.0078125
    %v930 = vmul.f32 %v909, 0.0078125
    %v931 = vmul.f32 %v911, 0.0078125
    %v932 = vmul.f32 %v913, 0.0078125
    %v933 = vmul.f32 %v915, 0.0078125
    %v934 = vmul.f32 %v917, 0.0078125
    %v935 = vmul.f32 %v919, 0.0078125
    %v936 = vsub.f32 %v824, %v920
    %v937 = vsub.f32 %v827, %v921
    %v938 = vsub.f32 %v832, %v922
    %v939 = vsub.f32 %v835, %v923
    %v940 = vsub.f32 %v840, %v924
    %v941 = vsub.f32 %v843, %v925
    %v942 = vsub.f32 %v848, %v926
    %v943 = vsub.f32 %v851, %v927
    %v944 = vsub.f32 %v856, %v928
    %v945 = vsub.f32 %v859, %v929
    %v946 = vsub.f32 %v864, %v930
    %v947 = vsub.f32 %v867, %v931
    %v948 = vsub.f32 %v872, %v932
    %v949 = vsub.f32 %v875, %v933
    %v950 = vsub.f32 %v880, %v934
    %v951 = vsub.f32 %v883, %v935
    %v952 = vmul.f32 %v936, %v936
    %v953 = vmul.f32 %v937, %v937
    %v954 = vmul.f32 %v938, %v938
    %v955 = vmul.f32 %v939, %v939
    %v956 = vmul.f32 %v940, %v940
    %v957 = vmul.f32 %v941, %v941
    %v958 = vmul.f32 %v942, %v942
    %v959 = vmul.f32 %v943, %v943
    %v960 = vmul.f32 %v944, %v944
    %v961 = vmul.f32 %v945, %v945
    %v962 = vmul.f32 %v946, %v946
    %v963 = vmul.f32 %v947, %v947
    %v964 = vmul.f32 %v948, %v948
    %v965 = vmul.f32 %v949, %v949
    %v966 = vmul.f32 %v950, %v950
    %v967 = vmul.f32 %v951, %v951
    %968 = vadd.xlane.f32.xlu0 %v952
    %v969 = vpop.xlane.xlu0 %968
    %970 = vadd.xlane.f32.xlu0 %v953
    %v971 = vpop.xlane.xlu0 %970
    %972 = vadd.xlane.f32.xlu0 %v954
    %v973 = vpop.xlane.xlu0 %972
    %974 = vadd.xlane.f32.xlu0 %v955
    %v975 = vpop.xlane.xlu0 %974
    %976 = vadd.xlane.f32.xlu0 %v956
    %v977 = vpop.xlane.xlu0 %976
    %978 = vadd.xlane.f32.xlu0 %v957
    %v979 = vpop.xlane.xlu0 %978
    %980 = vadd.xlane.f32.xlu0 %v958
    %v981 = vpop.xlane.xlu0 %980
    %982 = vadd.xlane.f32.xlu0 %v959
    %v983 = vpop.xlane.xlu0 %982
    %984 = vadd.xlane.f32.xlu0 %v960
    %v985 = vpop.xlane.xlu0 %984
    %986 = vadd.xlane.f32.xlu0 %v961
    %v987 = vpop.xlane.xlu0 %986
    %988 = vadd.xlane.f32.xlu0 %v962
    %v989 = vpop.xlane.xlu0 %988
    %990 = vadd.xlane.f32.xlu0 %v963
    %v991 = vpop.xlane.xlu0 %990
    %992 = vadd.xlane.f32.xlu0 %v964
    %v993 = vpop.xlane.xlu0 %992
    %994 = vadd.xlane.f32.xlu0 %v965
    %v995 = vpop.xlane.xlu0 %994
    %996 = vadd.xlane.f32.xlu0 %v966
    %v997 = vpop.xlane.xlu0 %996
    %998 = vadd.xlane.f32.xlu0 %v967
    %v999 = vpop.xlane.xlu0 %998
    %v1000 = vmul.f32 %v969, 0.0078125
    %v1001 = vmul.f32 %v971, 0.0078125
    %v1002 = vmul.f32 %v973, 0.0078125
    %v1003 = vmul.f32 %v975, 0.0078125
    %v1004 = vmul.f32 %v977, 0.0078125
    %v1005 = vmul.f32 %v979, 0.0078125
    %v1006 = vmul.f32 %v981, 0.0078125
    %v1007 = vmul.f32 %v983, 0.0078125
    %v1008 = vmul.f32 %v985, 0.0078125
    %v1009 = vmul.f32 %v987, 0.0078125
    %v1010 = vmul.f32 %v989, 0.0078125
    %v1011 = vmul.f32 %v991, 0.0078125
    %v1012 = vmul.f32 %v993, 0.0078125
    %v1013 = vmul.f32 %v995, 0.0078125
    %v1014 = vmul.f32 %v997, 0.0078125
    %v1015 = vmul.f32 %v999, 0.0078125
    %v1016 = vadd.f32 %v1000, 1e-05
    %v1017 = vadd.f32 %v1001, 1e-05
    %v1018 = vadd.f32 %v1002, 1e-05
    %v1019 = vadd.f32 %v1003, 1e-05
    %v1020 = vadd.f32 %v1004, 1e-05
    %v1021 = vadd.f32 %v1005, 1e-05
    %v1022 = vadd.f32 %v1006, 1e-05
    %v1023 = vadd.f32 %v1007, 1e-05
    %v1024 = vadd.f32 %v1008, 1e-05
    %v1025 = vadd.f32 %v1009, 1e-05
    %v1026 = vadd.f32 %v1010, 1e-05
    %v1027 = vadd.f32 %v1011, 1e-05
    %v1028 = vadd.f32 %v1012, 1e-05
    %v1029 = vadd.f32 %v1013, 1e-05
    %v1030 = vadd.f32 %v1014, 1e-05
    %v1031 = vadd.f32 %v1015, 1e-05
    %v1032 = vrsqrt.pop %v1016
    %v1033 = vrsqrt.pop %v1017
    %v1034 = vrsqrt.pop %v1018
    %v1035 = vrsqrt.pop %v1019
    %v1036 = vrsqrt.pop %v1020
    %v1037 = vrsqrt.pop %v1021
    %v1038 = vrsqrt.pop %v1022
    %v1039 = vrsqrt.pop %v1023
    %v1040 = vrsqrt.pop %v1024
    %v1041 = vrsqrt.pop %v1025
    %v1042 = vrsqrt.pop %v1026
    %v1043 = vrsqrt.pop %v1027
    %v1044 = vrsqrt.pop %v1028
    %v1045 = vrsqrt.pop %v1029
    %v1046 = vrsqrt.pop %v1030
    %v1047 = vrsqrt.pop %v1031
    %v1049 = vlaneseq
    %v1050 = vshrl.u32 %v1049, 7
    %v1051 = vsub.s32 0, %v1050
    %v1052 = vrot.slane %v886, %v1051
    %v1054 = vmul.f32 %v1032, %v1052
    %v1055 = vmul.f32 %v1033, %v1052
    %v1056 = vmul.f32 %v1034, %v1052
    %v1057 = vmul.f32 %v1035, %v1052
    %v1058 = vmul.f32 %v1036, %v1052
    %v1059 = vmul.f32 %v1037, %v1052
    %v1060 = vmul.f32 %v1038, %v1052
    %v1061 = vmul.f32 %v1039, %v1052
    %v1062 = vmul.f32 %v1040, %v1052
    %v1063 = vmul.f32 %v1041, %v1052
    %v1064 = vmul.f32 %v1042, %v1052
    %v1065 = vmul.f32 %v1043, %v1052
    %v1066 = vmul.f32 %v1044, %v1052
    %v1067 = vmul.f32 %v1045, %v1052
    %v1068 = vmul.f32 %v1046, %v1052
    %v1069 = vmul.f32 %v1047, %v1052
    %v1070 = vmul.f32 %v936, %v1054
    %v1071 = vmul.f32 %v937, %v1055
    %v1072 = vmul.f32 %v938, %v1056
    %v1073 = vmul.f32 %v939, %v1057
    %v1074 = vmul.f32 %v940, %v1058
    %v1075 = vmul.f32 %v941, %v1059
    %v1076 = vmul.f32 %v942, %v1060
    %v1077 = vmul.f32 %v943, %v1061
    %v1078 = vmul.f32 %v944, %v1062
    %v1079 = vmul.f32 %v945, %v1063
    %v1080 = vmul.f32 %v946, %v1064
    %v1081 = vmul.f32 %v947, %v1065
    %v1082 = vmul.f32 %v948, %v1066
    %v1083 = vmul.f32 %v949, %v1067
    %v1084 = vmul.f32 %v950, %v1068
    %v1085 = vmul.f32 %v951, %v1069
    %v1087 = vlaneseq
    %v1088 = vshrl.u32 %v1087, 7
    %v1089 = vsub.s32 0, %v1088
    %v1090 = vrot.slane %v887, %v1089
    %v1092 = vadd.f32 %v1070, %v1090
    %v1093 = vadd.f32 %v1071, %v1090
    %v1094 = vadd.f32 %v1072, %v1090
    %v1095 = vadd.f32 %v1073, %v1090
    %v1096 = vadd.f32 %v1074, %v1090
    %v1097 = vadd.f32 %v1075, %v1090
    %v1098 = vadd.f32 %v1076, %v1090
    %v1099 = vadd.f32 %v1077, %v1090
    %v1100 = vadd.f32 %v1078, %v1090
    %v1101 = vadd.f32 %v1079, %v1090
    %v1102 = vadd.f32 %v1080, %v1090
    %v1103 = vadd.f32 %v1081, %v1090
    %v1104 = vadd.f32 %v1082, %v1090
    %v1105 = vadd.f32 %v1083, %v1090
    %v1106 = vadd.f32 %v1084, %v1090
    %v1107 = vadd.f32 %v1085, %v1090
    %v1108 = vmax.f32 %v1092, 0.0
    %v1109 = vmax.f32 %v1093, 0.0
    %v1110 = vmax.f32 %v1094, 0.0
    %v1111 = vmax.f32 %v1095, 0.0
    %v1112 = vmax.f32 %v1096, 0.0
    %v1113 = vmax.f32 %v1097, 0.0
    %v1114 = vmax.f32 %v1098, 0.0
    %v1115 = vmax.f32 %v1099, 0.0
    %v1116 = vmax.f32 %v1100, 0.0
    %v1117 = vmax.f32 %v1101, 0.0
    %v1118 = vmax.f32 %v1102, 0.0
    %v1119 = vmax.f32 %v1103, 0.0
    %v1120 = vmax.f32 %v1104, 0.0
    %v1121 = vmax.f32 %v1105, 0.0
    %v1122 = vmax.f32 %v1106, 0.0
    %v1123 = vmax.f32 %v1107, 0.0
    %v1124 = vld [vmem:[%s9] sm:$0xff]
    %v1125 = vld [vmem:[%s9 + $0x8] sm:$0xff]
    %v1126 = vld [vmem:[%s9 + $0x10] sm:$0xff]
    %v1127 = vld [vmem:[%s9 + $0x18] sm:$0xff]
    %v1128 = vld [vmem:[%s9 + $0x20] sm:$0xff]
    %v1129 = vld [vmem:[%s9 + $0x28] sm:$0xff]
    %v1130 = vld [vmem:[%s9 + $0x30] sm:$0xff]
    %v1131 = vld [vmem:[%s9 + $0x38] sm:$0xff]
    %v1132 = vld [vmem:[%s9 + $0x40] sm:$0xff]
    %v1133 = vld [vmem:[%s9 + $0x48] sm:$0xff]
    %v1134 = vld [vmem:[%s9 + $0x50] sm:$0xff]
    %v1135 = vld [vmem:[%s9 + $0x58] sm:$0xff]
    %v1136 = vld [vmem:[%s9 + $0x60] sm:$0xff]
    %v1137 = vld [vmem:[%s9 + $0x68] sm:$0xff]
    %v1138 = vld [vmem:[%s9 + $0x70] sm:$0xff]
    %v1139 = vld [vmem:[%s9 + $0x78] sm:$0xff]
    %1140 = vmatprep.subr.mxu0 0.0
    %1141 = vmatpush1.msra.mxu0 %v1139
    %1142 = vmatprep.subr.mxu0 0.0
    %1143 = vmatpush1.msra.mxu0 %v1138
    %1144 = vmatprep.subr.mxu0 0.0
    %1145 = vmatpush1.msra.mxu0 %v1137
    %1146 = vmatprep.subr.mxu0 0.0
    %1147 = vmatpush1.msra.mxu0 %v1136
    %1148 = vmatprep.subr.mxu0 0.0
    %1149 = vmatpush1.msra.mxu0 %v1135
    %1150 = vmatprep.subr.mxu0 0.0
    %1151 = vmatpush1.msra.mxu0 %v1134
    %1152 = vmatprep.subr.mxu0 0.0
    %1153 = vmatpush1.msra.mxu0 %v1133
    %1154 = vmatprep.subr.mxu0 0.0
    %1155 = vmatpush1.msra.mxu0 %v1132
    %1156 = vmatprep.subr.mxu0 0.0
    %1157 = vmatpush1.msra.mxu0 %v1131
    %1158 = vmatprep.subr.mxu0 0.0
    %1159 = vmatpush1.msra.mxu0 %v1130
    %1160 = vmatprep.subr.mxu0 0.0
    %1161 = vmatpush1.msra.mxu0 %v1129
    %1162 = vmatprep.subr.mxu0 0.0
    %1163 = vmatpush1.msra.mxu0 %v1128
    %1164 = vmatprep.subr.mxu0 0.0
    %1165 = vmatpush1.msra.mxu0 %v1127
    %1166 = vmatprep.subr.mxu0 0.0
    %1167 = vmatpush1.msra.mxu0 %v1126
    %1168 = vmatprep.subr.mxu0 0.0
    %1169 = vmatpush1.msra.mxu0 %v1125
    %1170 = vmatprep.subr.mxu0 0.0
    %1171 = vmatpush1.msra.mxu0 %v1124
    %1172 = vmatprep.subr.mxu0 0.0
    %1173 = vmatpush2.msra.mxu0 0.0
    %1174 = vmatprep.subr.mxu0 0.0
    %1175 = vmatpush2.msra.mxu0 0.0
    %1176 = vmatprep.subr.mxu0 0.0
    %1177 = vmatpush2.msra.mxu0 0.0
    %1178 = vmatprep.subr.mxu0 0.0
    %1179 = vmatpush2.msra.mxu0 0.0
    %1180 = vmatprep.subr.mxu0 0.0
    %1181 = vmatpush2.msra.mxu0 0.0
    %1182 = vmatprep.subr.mxu0 0.0
    %1183 = vmatpush2.msra.mxu0 0.0
    %1184 = vmatprep.subr.mxu0 0.0
    %1185 = vmatpush2.msra.mxu0 0.0
    %1186 = vmatprep.subr.mxu0 0.0
    %1187 = vmatpush2.msra.mxu0 0.0
    %1188 = vmatprep.subr.mxu0 0.0
    %1189 = vmatpush2.msra.mxu0 0.0
    %1190 = vmatprep.subr.mxu0 0.0
    %1191 = vmatpush2.msra.mxu0 0.0
    %1192 = vmatprep.subr.mxu0 0.0
    %1193 = vmatpush2.msra.mxu0 0.0
    %1194 = vmatprep.subr.mxu0 0.0
    %1195 = vmatpush2.msra.mxu0 0.0
    %1196 = vmatprep.subr.mxu0 0.0
    %1197 = vmatpush2.msra.mxu0 0.0
    %1198 = vmatprep.subr.mxu0 0.0
    %1199 = vmatpush2.msra.mxu0 0.0
    %1200 = vmatprep.subr.mxu0 0.0
    %1201 = vmatpush2.msra.mxu0 0.0
    %1202 = vmatprep.subr.mxu0 0.0
    %1203 = vmatpush2.msra.mxu0 0.0
    %1204 = vmatprep.mubr.f32.mxu0 0.0
    %1205 = vmatmul.mubr.f32.gmra.mxu0 %v1108
    %v1206 = vpop.f32.mrf.mxu0
    %v1207 = vadd.f32 0.0, %v1206
    %v1208 = vpop.f32.mrf.mxu0
    %1209 = vmatprep.mubr.f32.mxu0 0.0
    %1210 = vmatmul.mubr.f32.gmra.mxu0 %v1109
    %v1211 = vpop.f32.mrf.mxu0
    %v1212 = vadd.f32 0.0, %v1211
    %v1213 = vpop.f32.mrf.mxu0
    %1214 = vmatprep.mubr.f32.mxu0 0.0
    %1215 = vmatmul.mubr.f32.gmra.mxu0 %v1110
    %v1216 = vpop.f32.mrf.mxu0
    %v1217 = vadd.f32 0.0, %v1216
    %v1218 = vpop.f32.mrf.mxu0
    %1219 = vmatprep.mubr.f32.mxu0 0.0
    %1220 = vmatmul.mubr.f32.gmra.mxu0 %v1111
    %v1221 = vpop.f32.mrf.mxu0
    %v1222 = vadd.f32 0.0, %v1221
    %v1223 = vpop.f32.mrf.mxu0
    %1224 = vmatprep.mubr.f32.mxu0 0.0
    %1225 = vmatmul.mubr.f32.gmra.mxu0 %v1112
    %v1226 = vpop.f32.mrf.mxu0
    %v1227 = vadd.f32 0.0, %v1226
    %v1228 = vpop.f32.mrf.mxu0
    %1229 = vmatprep.mubr.f32.mxu0 0.0
    %1230 = vmatmul.mubr.f32.gmra.mxu0 %v1113
    %v1231 = vpop.f32.mrf.mxu0
    %v1232 = vadd.f32 0.0, %v1231
    %v1233 = vpop.f32.mrf.mxu0
    %1234 = vmatprep.mubr.f32.mxu0 0.0
    %1235 = vmatmul.mubr.f32.gmra.mxu0 %v1114
    %v1236 = vpop.f32.mrf.mxu0
    %v1237 = vadd.f32 0.0, %v1236
    %v1238 = vpop.f32.mrf.mxu0
    %1239 = vmatprep.mubr.f32.mxu0 0.0
    %1240 = vmatmul.mubr.f32.gmra.mxu0 %v1115
    %v1241 = vpop.f32.mrf.mxu0
    %v1242 = vadd.f32 0.0, %v1241
    %v1243 = vpop.f32.mrf.mxu0
    %1244 = vmatprep.mubr.f32.mxu0 0.0
    %1245 = vmatmul.mubr.f32.gmra.mxu0 %v1116
    %v1246 = vpop.f32.mrf.mxu0
    %v1247 = vadd.f32 0.0, %v1246
    %v1248 = vpop.f32.mrf.mxu0
    %1249 = vmatprep.mubr.f32.mxu0 0.0
    %1250 = vmatmul.mubr.f32.gmra.mxu0 %v1117
    %v1251 = vpop.f32.mrf.mxu0
    %v1252 = vadd.f32 0.0, %v1251
    %v1253 = vpop.f32.mrf.mxu0
    %1254 = vmatprep.mubr.f32.mxu0 0.0
    %1255 = vmatmul.mubr.f32.gmra.mxu0 %v1118
    %v1256 = vpop.f32.mrf.mxu0
    %v1257 = vadd.f32 0.0, %v1256
    %v1258 = vpop.f32.mrf.mxu0
    %1259 = vmatprep.mubr.f32.mxu0 0.0
    %1260 = vmatmul.mubr.f32.gmra.mxu0 %v1119
    %v1261 = vpop.f32.mrf.mxu0
    %v1262 = vadd.f32 0.0, %v1261
    %v1263 = vpop.f32.mrf.mxu0
    %1264 = vmatprep.mubr.f32.mxu0 0.0
    %1265 = vmatmul.mubr.f32.gmra.mxu0 %v1120
    %v1266 = vpop.f32.mrf.mxu0
    %v1267 = vadd.f32 0.0, %v1266
    %v1268 = vpop.f32.mrf.mxu0
    %1269 = vmatprep.mubr.f32.mxu0 0.0
    %1270 = vmatmul.mubr.f32.gmra.mxu0 %v1121
    %v1271 = vpop.f32.mrf.mxu0
    %v1272 = vadd.f32 0.0, %v1271
    %v1273 = vpop.f32.mrf.mxu0
    %1274 = vmatprep.mubr.f32.mxu0 0.0
    %1275 = vmatmul.mubr.f32.gmra.mxu0 %v1122
    %v1276 = vpop.f32.mrf.mxu0
    %v1277 = vadd.f32 0.0, %v1276
    %v1278 = vpop.f32.mrf.mxu0
    %1279 = vmatprep.mubr.f32.mxu0 0.0
    %1280 = vmatmul.mubr.f32.gmra.mxu0 %v1123
    %v1281 = vpop.f32.mrf.mxu0
    %v1282 = vadd.f32 0.0, %v1281
    %v1283 = vpop.f32.mrf.mxu0
    %1284 = vdwg.mxu0
    %vm1285 = vcmask 7168
    %1286 = vst.msk [vmem:[#allocation6] sm:$0xff] %vm1285, %v1207
    %1287 = vst.msk [vmem:[#allocation6 + $0x8] sm:$0xff] %vm1285, %v1212
    %1288 = vst.msk [vmem:[#allocation6 + $0x10] sm:$0xff] %vm1285, %v1217
    %1289 = vst.msk [vmem:[#allocation6 + $0x18] sm:$0xff] %vm1285, %v1222
    %1290 = vst.msk [vmem:[#allocation6 + $0x20] sm:$0xff] %vm1285, %v1227
    %1291 = vst.msk [vmem:[#allocation6 + $0x28] sm:$0xff] %vm1285, %v1232
    %1292 = vst.msk [vmem:[#allocation6 + $0x30] sm:$0xff] %vm1285, %v1237
    %1293 = vst.msk [vmem:[#allocation6 + $0x38] sm:$0xff] %vm1285, %v1242
    %1294 = vst.msk [vmem:[#allocation6 + $0x40] sm:$0xff] %vm1285, %v1247
    %1295 = vst.msk [vmem:[#allocation6 + $0x48] sm:$0xff] %vm1285, %v1252
    %1296 = vst.msk [vmem:[#allocation6 + $0x50] sm:$0xff] %vm1285, %v1257
    %1297 = vst.msk [vmem:[#allocation6 + $0x58] sm:$0xff] %vm1285, %v1262
    %1298 = vst.msk [vmem:[#allocation6 + $0x60] sm:$0xff] %vm1285, %v1267
    %1299 = vst.msk [vmem:[#allocation6 + $0x68] sm:$0xff] %vm1285, %v1272
    %1300 = vst.msk [vmem:[#allocation6 + $0x70] sm:$0xff] %vm1285, %v1277
    %1301 = vst.msk [vmem:[#allocation6 + $0x78] sm:$0xff] %vm1285, %v1282
    // Predicated region
    $region50: #{tpu_custom_call.1} parent=1 // pred_check
      _
    $region51: #{tpu_custom_call.1} parent=1 // pred_check_branch
      %1303 = sbr.rel (0) target = $region53
    $region52: #{tpu_custom_call.1} parent=1 // pred_region
      // Predicated region
      $region54: #{tpu_custom_call.1} parent=52 // pred_check
        _
      $region55: #{tpu_custom_call.1} parent=52 // pred_check_branch
        %1305 = sbr.rel (0) target = $region57
      $region56: #{tpu_custom_call.1} parent=52 // pred_region
        // Predicated region
        $region58: #{tpu_custom_call.1} parent=56 // pred_check
          _
        $region59: #{tpu_custom_call.1} parent=56 // pred_check_branch
          %1307 = sbr.rel (0) target = $region61
        $region60: #{tpu_custom_call.1} parent=56 // pred_region
          // Predicated region
          $region73: #{tpu_custom_call.1} parent=60 // pred_check
            _
          $region74: #{tpu_custom_call.1} parent=60 // pred_check_branch
            %1325 = sbr.rel (0) target = $region76
          $region75: #{tpu_custom_call.1} parent=60 // pred_region
            loop: start=0, step=1, limit=1
            $region77: #{tpu_custom_call.1} parent=75 // loop_pre_header
              _
            $region78: #{tpu_custom_call.1} parent=75 // loop_header
              %s1327 = sphi 0, %s1331
              %p1328 = scmp.ge.s32.totalorder %s1327, 1
              %s1332 = sphi [#allocation6], [#allocation6]
              %s1333 = sphi %s10, %s10
            $region79: #{tpu_custom_call.1} parent=75 // loop_header_branch
              %1330 = sbr.rel (%p1328) target = $region83
            $region80: #{tpu_custom_call.1} parent=75 // loop_body
              %v1334 = vld [vmem:[%s1332] sm:$0xff]
              %1335 = vst [vmem:[%s1333] sm:$0xff] %v1334
              %v1336 = vld [vmem:[%s1332 + $0x8] sm:$0xff]
              %1337 = vst [vmem:[%s1333 + $0x8] sm:$0xff] %v1336
            $region81: #{tpu_custom_call.1} parent=75 // loop_footer
              %s1331 = sadd.s32 1, %s1327
            $region82: #{tpu_custom_call.1} parent=75 // loop_footer_branch
              %1326 = sbr.rel target = $region78
            $region83: #{tpu_custom_call.1} parent=75 // loop_exit
              _
          $region76: #{tpu_custom_call.1} parent=60 // pred_fallthru
            _
          // Predicated region
          $region84: #{tpu_custom_call.1} parent=60 // pred_check
            _
          $region85: #{tpu_custom_call.1} parent=60 // pred_check_branch
            %1339 = sbr.rel target = $region87
          $region86: #{tpu_custom_call.1} parent=60 // pred_region
            _
          $region87: #{tpu_custom_call.1} parent=60 // pred_fallthru
            _
        $region61: #{tpu_custom_call.1} parent=56 // pred_fallthru
          _
        // Predicated region
        $region62: #{tpu_custom_call.1} parent=56 // pred_check
          _
        $region63: #{tpu_custom_call.1} parent=56 // pred_check_branch
          %1309 = sbr.rel target = $region65
        $region64: #{tpu_custom_call.1} parent=56 // pred_region
          %s1311 = ssub.s32 256, 1
          loop: start=0, step=1, limit=1
          $region66: #{tpu_custom_call.1} parent=64 // loop_pre_header
            _
          $region67: #{tpu_custom_call.1} parent=64 // loop_header
            %s1313 = sphi 0, %s1317
            %p1314 = scmp.ge.s32.totalorder %s1313, 1
            %s1318 = sphi [#allocation6], [#allocation6]
            %s1319 = sphi %s10, %s10
          $region68: #{tpu_custom_call.1} parent=64 // loop_header_branch
            %1316 = sbr.rel (%p1314) target = $region72
          $region69: #{tpu_custom_call.1} parent=64 // loop_body
            %v1320 = vld [vmem:[%s1318] sm:%s1311]
            %1321 = vst [vmem:[%s1319] sm:%s1311] %v1320
            %v1322 = vld [vmem:[%s1318 + $0x8] sm:%s1311]
            %1323 = vst [vmem:[%s1319 + $0x8] sm:%s1311] %v1322
          $region70: #{tpu_custom_call.1} parent=64 // loop_footer
            %s1317 = sadd.s32 1, %s1313
          $region71: #{tpu_custom_call.1} parent=64 // loop_footer_branch
            %1312 = sbr.rel target = $region67
          $region72: #{tpu_custom_call.1} parent=64 // loop_exit
            _
        $region65: #{tpu_custom_call.1} parent=56 // pred_fallthru
          _
      $region57: #{tpu_custom_call.1} parent=52 // pred_fallthru
        _
      %1340 = vnop
    $region53: #{tpu_custom_call.1} parent=1 // pred_fallthru
      _
    // Predicated region
    $region88: #{tpu_custom_call.1} parent=1 // pred_check
      _
    $region89: #{tpu_custom_call.1} parent=1 // pred_check_branch
      %1342 = sbr.rel (0) target = $region91
    $region90: #{tpu_custom_call.1} parent=1 // pred_region
      _
    $region91: #{tpu_custom_call.1} parent=1 // pred_fallthru
      _
    %1343 = vsyncpa [#allocation3], 1
    %1344 = vsyncpa [#allocation5], 1

</llo_original>
